<compile_context>
chip_gen: v6e
topology: v6e:2x2x1
jax: 0.10.0
libtpu: 0.0.40
codegen_flags: <defaults>
</compile_context>

<pallas_src>
import math
from functools import partial

import jax
import jax.numpy as jnp
from jax.experimental import pallas as pl
from jax.experimental.pallas import tpu as pltpu


# ---------------------------------------------------------------------------
# Tiling helpers
# ---------------------------------------------------------------------------

_LANE = 128      # last-dim alignment
_SUBLANE = 8     # second-to-last-dim alignment
# Safe explicit scoped-VMEM limit on every generation (<= 64 MiB physical on
# v7x, well under 128 MiB on v5e/v6e); tiles below are sized to fit it with
# double-buffering.
_VMEM_LIMIT_BYTES = 32 * 1024 * 1024


def _pick_tile(dim: int, target: int, align: int) -> int:
    """Largest tile <= target that divides `dim` and is `align`-aligned.

    Falls back to the full dimension (always a legal block shape) when the dim
    is already small or no aligned divisor exists.
    """
    if dim <= target:
        return dim
    t = (target // align) * align
    while t >= align:
        if dim % t == 0:
            return t
        t -= align
    return dim


# ---------------------------------------------------------------------------
# Tiled matmul kernels (bf16 MXU operands, f32 accumulation)
# ---------------------------------------------------------------------------

def _mm_kernel(x_ref, w_ref, o_ref, acc_ref):
    @pl.when(pl.program_id(2) == 0)
    def _init():
        acc_ref[...] = jnp.zeros_like(acc_ref)

    acc_ref[...] += jnp.dot(
        x_ref[...].astype(jnp.bfloat16),
        w_ref[...].astype(jnp.bfloat16),
        preferred_element_type=jnp.float32,
    )

    @pl.when(pl.program_id(2) == pl.num_programs(2) - 1)
    def _finalize():
        o_ref[...] = acc_ref[...].astype(o_ref.dtype)


def _mm_bias_kernel(x_ref, w_ref, b_ref, o_ref, acc_ref):
    @pl.when(pl.program_id(2) == 0)
    def _init():
        acc_ref[...] = jnp.zeros_like(acc_ref)

    acc_ref[...] += jnp.dot(
        x_ref[...].astype(jnp.bfloat16),
        w_ref[...].astype(jnp.bfloat16),
        preferred_element_type=jnp.float32,
    )

    @pl.when(pl.program_id(2) == pl.num_programs(2) - 1)
    def _finalize():
        o_ref[...] = (acc_ref[...] + b_ref[...].astype(jnp.float32)).astype(o_ref.dtype)


def pallas_matmul(x, w_t, bias=None, *, tm_target=512, tn_target=512, tk_target=512):
    """y = x @ w_t (+ bias).  w_t is (K, N) (already transposed); bias is (N,)."""
    M, K = x.shape
    K2, N = w_t.shape
    assert K == K2, (K, K2)

    tm = _pick_tile(M, tm_target, _SUBLANE)
    tn = _pick_tile(N, tn_target, _LANE)
    tk = _pick_tile(K, tk_target, _LANE)
    grid = (M // tm, N // tn, K // tk)

    in_specs = [
        pl.BlockSpec((tm, tk), lambda i, j, k: (i, k)),
        pl.BlockSpec((tk, tn), lambda i, j, k: (k, j)),
    ]
    args = (x, w_t)
    kernel = _mm_kernel
    if bias is not None:
        in_specs.append(pl.BlockSpec((1, tn), lambda i, j, k: (0, j)))
        args = (x, w_t, bias.reshape(1, N))
        kernel = _mm_bias_kernel

    return pl.pallas_call(
        kernel,
        out_shape=jax.ShapeDtypeStruct((M, N), x.dtype),
        grid=grid,
        in_specs=in_specs,
        out_specs=pl.BlockSpec((tm, tn), lambda i, j, k: (i, j)),
        scratch_shapes=[pltpu.VMEM((tm, tn), jnp.float32)],
        compiler_params=pltpu.CompilerParams(
            dimension_semantics=("parallel", "parallel", "arbitrary"),
            vmem_limit_bytes=_VMEM_LIMIT_BYTES,
        ),
    )(*args)


# ---------------------------------------------------------------------------
# Multi-head cross-attention kernel (heads sliced in-kernel, no transposes)
# ---------------------------------------------------------------------------

def _mha_kernel(q_ref, k_ref, v_ref, o_ref, *, heads, scale):
    # q_ref: (tq, hidden)  k_ref/v_ref: (Skv, hidden)  o_ref: (tq, hidden)
    hidden = q_ref.shape[-1]
    d = hidden // heads

    q = q_ref[...].astype(jnp.float32) * scale   # fold scale into q once (Sq*d work)
    k = k_ref[...]
    v = v_ref[...]

    for h in range(heads):                       # static, unrolled head loop
        sl = slice(h * d, (h + 1) * d)
        qh = q[:, sl].astype(jnp.bfloat16)       # (tq, d)
        kh = k[:, sl].astype(jnp.bfloat16)       # (Skv, d)
        vh = v[:, sl].astype(jnp.bfloat16)       # (Skv, d)

        # scores = qh @ kh.T  (contract last dims; no explicit transpose)
        s = jax.lax.dot_general(
            qh, kh, (((1,), (1,)), ((), ())),
            preferred_element_type=jnp.float32)  # (tq, Skv), f32

        m = jnp.max(s, axis=-1, keepdims=True)
        p = jnp.exp(s - m)
        l = jnp.sum(p, axis=-1, keepdims=True)
        p = (p * pl.reciprocal(l, approx=True)).astype(jnp.bfloat16)

        o = jnp.dot(p, vh, preferred_element_type=jnp.float32)   # (tq, d)
        o_ref[:, sl] = o.astype(o_ref.dtype)


def pallas_mha(q, k, v, *, heads, scale, tq_target=256):
    B, Sq, hidden = q.shape
    _, Skv, _ = k.shape
    tq = _pick_tile(Sq, tq_target, _SUBLANE)
    grid = (B, Sq // tq)

    return pl.pallas_call(
        partial(_mha_kernel, heads=heads, scale=scale),
        out_shape=jax.ShapeDtypeStruct((B, Sq, hidden), q.dtype),
        grid=grid,
        in_specs=[
            pl.BlockSpec((None, tq, hidden), lambda b, qi: (b, qi, 0)),
            pl.BlockSpec((None, Skv, hidden), lambda b, qi: (b, 0, 0)),
            pl.BlockSpec((None, Skv, hidden), lambda b, qi: (b, 0, 0)),
        ],
        out_specs=pl.BlockSpec((None, tq, hidden), lambda b, qi: (b, qi, 0)),
        compiler_params=pltpu.CompilerParams(
            dimension_semantics=("parallel", "parallel"),
            vmem_limit_bytes=_VMEM_LIMIT_BYTES,
        ),
    )(q, k, v)


# ---------------------------------------------------------------------------
# One-time parameter preparation (outside the hot path)
# ---------------------------------------------------------------------------

def prepare_params(params):
    """Pre-transpose weights and fold the LoRA branches into the IP weights.

    key   = e@Wk^T + (e@Wk^T)@Ak^T@Bk^T == e @ (Wk^T + Wk^T@Ak^T@Bk^T)
    value = analogous.  The fused K and V weights are concatenated along the
    output dim so one matmul over encoder_hidden_states produces both.
    """
    f32 = jnp.float32

    def fold(w, a, b):
        wt = w.T.astype(f32)                                   # (cross, hidden)
        return wt + wt @ (a.T.astype(f32) @ b.T.astype(f32))   # (cross, hidden)

    k_w = fold(params["to_k_ip_w"], params["lora_k_w"], params["lora_k_proj_w"])
    v_w = fold(params["to_v_ip_w"], params["lora_v_w"], params["lora_v_proj_w"])
    dtype = params["to_k_ip_w"].dtype
    return {
        "to_q_wt": params["to_q_w"].T,                               # (hidden, hidden)
        "kv_wt": jnp.concatenate([k_w, v_w], axis=1).astype(dtype),  # (cross, 2*hidden)
        "to_out_wt": params["to_out_w"].T,                           # (hidden, hidden)
        "to_out_b": params["to_out_b"],                              # (hidden,)
    }


# ---------------------------------------------------------------------------
# Module forward
# ---------------------------------------------------------------------------

def lora_ip_attn_forward(prepared, hidden_states, encoder_hidden_states, *, heads):
    """Replicates LoRAIPAttnProcessor.forward with a standard diffusers `attn`:
    to_q (no bias), head split, softmax(QK^T/sqrt(d)) V, head merge,
    to_out[0] (Linear + bias), to_out[1] (Dropout = identity in eval)."""
    B, Sq, hidden = hidden_states.shape
    _, Skv, _cross = encoder_hidden_states.shape
    head_dim = hidden // heads
    scale = 1.0 / math.sqrt(head_dim)

    hs2 = hidden_states.reshape(B * Sq, hidden)
    ehs2 = encoder_hidden_states.reshape(B * Skv, _cross)

    # query = attn.to_q(hidden_states)
    query = pallas_matmul(hs2, prepared["to_q_wt"])                  # (B*Sq, hidden)

    # key / value: IP projections with the LoRA already folded into the weight,
    # produced by a single fused matmul over the encoder states.
    kv = pallas_matmul(ehs2, prepared["kv_wt"]).reshape(B, Skv, 2 * hidden)
    key, value = kv[..., :hidden], kv[..., hidden:]

    # Attention with heads handled inside the kernel (no head_to_batch /
    # batch_to_head transposes; output stays lane-dense in (B, Sq, hidden)).
    attn_out = pallas_mha(query.reshape(B, Sq, hidden), key, value,
                          heads=heads, scale=scale)

    # to_out[0] (Linear with bias); to_out[1] Dropout is identity in eval mode.
    out = pallas_matmul(attn_out.reshape(B * Sq, hidden),
                        prepared["to_out_wt"], bias=prepared["to_out_b"])
    return out.reshape(B, Sq, hidden)


# ---------------------------------------------------------------------------
# Pure-JAX f32 reference
# ---------------------------------------------------------------------------

def reference_forward(params, hidden_states, encoder_hidden_states, *, heads):
    B, Sq, hidden = hidden_states.shape
    _, Skv, _cross = encoder_hidden_states.shape
    head_dim = hidden // heads
    scale = 1.0 / math.sqrt(head_dim)

    query = hidden_states @ params["to_q_w"].T
    key = encoder_hidden_states @ params["to_k_ip_w"].T
    value = encoder_hidden_states @ params["to_v_ip_w"].T
    key = key + (key @ params["lora_k_w"].T) @ params["lora_k_proj_w"].T
    value = value + (value @ params["lora_v_w"].T) @ params["lora_v_proj_w"].T

    def h2b(x, S):
        return jnp.transpose(
            x.reshape(B, S, heads, head_dim), (0, 2, 1, 3)
        ).reshape(B * heads, S, head_dim)

    q, k, v = h2b(query, Sq), h2b(key, Skv), h2b(value, Skv)
    s = jnp.einsum("bqd,bkd->bqk", q, k) * scale
    p = jax.nn.softmax(s, axis=-1)
    o = jnp.einsum("bqk,bkd->bqd", p, v)
    o = jnp.transpose(
        o.reshape(B, heads, Sq, head_dim), (0, 2, 1, 3)
    ).reshape(B, Sq, hidden)
    return o @ params["to_out_w"].T + params["to_out_b"]


# ---------------------------------------------------------------------------
# Main
# ---------------------------------------------------------------------------

if __name__ == "__main__":
    hidden_size = 32
    cross_attention_dim = 32
    rank = 4
    heads = 4
    B, Sq, Skv = 2, 16, 8
    dtype = jnp.float32

    key = jax.random.PRNGKey(0)
    ks = jax.random.split(key, 12)

    def init(k, shape, scale=0.05):
        return (scale * jax.random.normal(k, shape)).astype(dtype)

    params = {
        # nn.Linear weights are (out_features, in_features)
        "to_q_w": init(ks[0], (hidden_size, hidden_size)),
        "to_k_ip_w": init(ks[1], (hidden_size, cross_attention_dim)),
        "to_v_ip_w": init(ks[2], (hidden_size, cross_attention_dim)),
        "lora_k_w": init(ks[3], (rank, hidden_size)),
        "lora_v_w": init(ks[4], (rank, hidden_size)),
        "lora_k_proj_w": init(ks[5], (hidden_size, rank)),
        "lora_v_proj_w": init(ks[6], (hidden_size, rank)),
        "to_out_w": init(ks[7], (hidden_size, hidden_size)),
        "to_out_b": init(ks[8], (hidden_size,)),
    }

    hidden_states = init(ks[9], (B, Sq, hidden_size), scale=1.0)
    encoder_hidden_states = init(ks[10], (B, Skv, cross_attention_dim), scale=1.0)

    # One-time parameter prep (transpose + LoRA fold + K/V fusion).
    prepared = prepare_params(params)

    fwd = jax.jit(partial(lora_ip_attn_forward, heads=heads))
    out = jax.block_until_ready(fwd(prepared, hidden_states, encoder_hidden_states))

    ref = reference_forward(params, hidden_states, encoder_hidden_states, heads=heads)
    assert out.shape == (B, Sq, hidden_size)
    # bf16 MXU operands (f32 accumulation) -> relaxed tolerance vs f32 reference.
    max_err = float(jnp.max(jnp.abs(out - ref)))
    assert jnp.allclose(out, ref, atol=2e-2, rtol=2e-2), (
        f"mismatch vs reference, max|diff|={max_err}")

    print("KERNEL_OK")
</pallas_src>

<mosaic_0001>
module attributes {stable_mosaic.version = 11 : i64} {
  func.func @_mm_kernel(%arg0: i32, %arg1: i32, %arg2: i32, %arg3: memref<32x32xf32, #tpu.memory_space<vmem>>, %arg4: memref<32x32xf32, #tpu.memory_space<vmem>>, %arg5: memref<32x32xf32, #tpu.memory_space<vmem>>, %arg6: memref<32x32xf32, #tpu.memory_space<vmem>>) attributes {dimension_semantics = [#tpu.dimension_semantics<parallel>, #tpu.dimension_semantics<parallel>, #tpu.dimension_semantics<arbitrary>], iteration_bounds = array<i64: 1, 1, 1>, scalar_prefetch = 0 : i64, scratch_operands = 1 : i64, tpu.core_type = #tpu.core_type<tc>, window_params = [{transform_indices = @transform_0, window_bounds = array<i64: 32, 32>}, {transform_indices = @transform_1, window_bounds = array<i64: 32, 32>}, {transform_indices = @transform_2, window_bounds = array<i64: 32, 32>}]} {
    %c0_i32 = arith.constant 0 : i32
    %0 = arith.cmpi eq, %arg2, %c0_i32 : i32
    %1 = arith.extui %0 : i1 to i32
    %c0_i32_0 = arith.constant 0 : i32
    %2 = arith.cmpi ne, %1, %c0_i32_0 : i32
    scf.if %2 {
      %cst_10 = arith.constant 0.000000e+00 : f32
      %14 = vector.broadcast %cst_10 : f32 to vector<32x32xf32>
      %c0_11 = arith.constant 0 : index
      %c0_12 = arith.constant 0 : index
      %15 = vector.load %arg6[%c0_11, %c0_12] : memref<32x32xf32, #tpu.memory_space<vmem>>, vector<32x32xf32>
      tpu.vector_store %arg6[%c0_11, %c0_12], %14 {strides = array<i32>} : memref<32x32xf32, #tpu.memory_space<vmem>>, vector<32x32xf32>,
    } else {
    }
    %c0 = arith.constant 0 : index
    %c0_1 = arith.constant 0 : index
    %3 = vector.load %arg6[%c0, %c0_1] : memref<32x32xf32, #tpu.memory_space<vmem>>, vector<32x32xf32>
    %c0_2 = arith.constant 0 : index
    %c0_3 = arith.constant 0 : index
    %4 = vector.load %arg3[%c0_2, %c0_3] : memref<32x32xf32, #tpu.memory_space<vmem>>, vector<32x32xf32>
    %5 = arith.truncf %4 : vector<32x32xf32> to vector<32x32xbf16>
    %c0_4 = arith.constant 0 : index
    %c0_5 = arith.constant 0 : index
    %6 = vector.load %arg4[%c0_4, %c0_5] : memref<32x32xf32, #tpu.memory_space<vmem>>, vector<32x32xf32>
    %7 = arith.truncf %6 : vector<32x32xf32> to vector<32x32xbf16>
    %cst = arith.constant dense<0.000000e+00> : vector<32x32xf32>
    %8 = tpu.matmul %5, %7, %cst {dimension_numbers = #tpu.dot_dimension_numbers<[1], [0], [0], [1], [0, 0, 1, 1], [], []>} : vector<32x32xbf16>, vector<32x32xbf16>, vector<32x32xf32> -> vector<32x32xf32>
    %9 = arith.addf %3, %8 : vector<32x32xf32>
    %c0_6 = arith.constant 0 : index
    %c0_7 = arith.constant 0 : index
    %10 = vector.load %arg6[%c0_6, %c0_7] : memref<32x32xf32, #tpu.memory_space<vmem>>, vector<32x32xf32>
    tpu.vector_store %arg6[%c0_6, %c0_7], %9 {strides = array<i32>} : memref<32x32xf32, #tpu.memory_space<vmem>>, vector<32x32xf32>,
    %c0_i32_8 = arith.constant 0 : i32
    %11 = arith.cmpi eq, %arg2, %c0_i32_8 : i32
    %12 = arith.extui %11 : i1 to i32
    %c0_i32_9 = arith.constant 0 : i32
    %13 = arith.cmpi ne, %12, %c0_i32_9 : i32
    scf.if %13 {
      %c0_10 = arith.constant 0 : index
      %c0_11 = arith.constant 0 : index
      %14 = vector.load %arg6[%c0_10, %c0_11] : memref<32x32xf32, #tpu.memory_space<vmem>>, vector<32x32xf32>
      %c0_12 = arith.constant 0 : index
      %c0_13 = arith.constant 0 : index
      %15 = vector.load %arg5[%c0_12, %c0_13] : memref<32x32xf32, #tpu.memory_space<vmem>>, vector<32x32xf32>
      tpu.vector_store %arg5[%c0_12, %c0_13], %14 {strides = array<i32>} : memref<32x32xf32, #tpu.memory_space<vmem>>, vector<32x32xf32>,
    } else {
    }
    return
  }
  func.func @transform_0(%arg0: i32, %arg1: i32, %arg2: i32) -> (i32, i32) {
    %c0_i32 = arith.constant 0 : i32
    return %arg0, %arg2 : i32, i32
  }
  func.func @transform_1(%arg0: i32, %arg1: i32, %arg2: i32) -> (i32, i32) {
    %c0_i32 = arith.constant 0 : i32
    return %arg2, %arg1 : i32, i32
  }
  func.func @transform_2(%arg0: i32, %arg1: i32, %arg2: i32) -> (i32, i32) {
    %c0_i32 = arith.constant 0 : i32
    return %arg0, %arg1 : i32, i32
  }
}

module attributes {stable_mosaic.version = 11 : i64} {
  func.func @_mha_kernel(%arg0: i32, %arg1: i32, %arg2: memref<1x16x32xf32, #tpu.memory_space<vmem>>, %arg3: memref<1x8x32xf32, #tpu.memory_space<vmem>>, %arg4: memref<1x8x32xf32, #tpu.memory_space<vmem>>, %arg5: memref<1x16x32xf32, #tpu.memory_space<vmem>>) attributes {dimension_semantics = [#tpu.dimension_semantics<parallel>, #tpu.dimension_semantics<parallel>], iteration_bounds = array<i64: 2, 1>, scalar_prefetch = 0 : i64, scratch_operands = 0 : i64, tpu.core_type = #tpu.core_type<tc>, window_params = [{transform_indices = @transform_0, window_bounds = array<i64: 1, 16, 32>}, {transform_indices = @transform_1, window_bounds = array<i64: 1, 8, 32>}, {transform_indices = @transform_2, window_bounds = array<i64: 1, 8, 32>}, {transform_indices = @transform_3, window_bounds = array<i64: 1, 16, 32>}]} {
    %c0 = arith.constant 0 : index
    %c0_0 = arith.constant 0 : index
    %c0_1 = arith.constant 0 : index
    %0 = vector.load %arg2[%c0, %c0_0, %c0_1] : memref<1x16x32xf32, #tpu.memory_space<vmem>>, vector<1x16x32xf32>
    %1 = vector.shape_cast %0 : vector<1x16x32xf32> to vector<16x32xf32>
    %cst = arith.constant 0.353553385 : f32
    %2 = vector.broadcast %cst : f32 to vector<16x32xf32>
    %3 = arith.mulf %1, %2 : vector<16x32xf32>
    %c0_2 = arith.constant 0 : index
    %c0_3 = arith.constant 0 : index
    %c0_4 = arith.constant 0 : index
    %4 = vector.load %arg3[%c0_2, %c0_3, %c0_4] : memref<1x8x32xf32, #tpu.memory_space<vmem>>, vector<1x8x32xf32>
    %5 = vector.shape_cast %4 : vector<1x8x32xf32> to vector<8x32xf32>
    %c0_5 = arith.constant 0 : index
    %c0_6 = arith.constant 0 : index
    %c0_7 = arith.constant 0 : index
    %6 = vector.load %arg4[%c0_5, %c0_6, %c0_7] : memref<1x8x32xf32, #tpu.memory_space<vmem>>, vector<1x8x32xf32>
    %7 = vector.shape_cast %6 : vector<1x8x32xf32> to vector<8x32xf32>
    %8 = vector.extract_strided_slice %3 {offsets = [0, 0], sizes = [16, 8], strides = [1, 1]} : vector<16x32xf32> to vector<16x8xf32>
    %9 = arith.truncf %8 : vector<16x8xf32> to vector<16x8xbf16>
    %10 = vector.extract_strided_slice %5 {offsets = [0, 0], sizes = [8, 8], strides = [1, 1]} : vector<8x32xf32> to vector<8x8xf32>
    %11 = arith.truncf %10 : vector<8x8xf32> to vector<8x8xbf16>
    %12 = vector.extract_strided_slice %7 {offsets = [0, 0], sizes = [8, 8], strides = [1, 1]} : vector<8x32xf32> to vector<8x8xf32>
    %13 = arith.truncf %12 : vector<8x8xf32> to vector<8x8xbf16>
    %cst_8 = arith.constant dense<0.000000e+00> : vector<16x8xf32>
    %14 = tpu.matmul %9, %11, %cst_8 {dimension_numbers = #tpu.dot_dimension_numbers<[1], [1], [0], [0], [0, 0, 1, 0], [], []>} : vector<16x8xbf16>, vector<8x8xbf16>, vector<16x8xf32> -> vector<16x8xf32>
    %cst_9 = arith.constant dense<0xFF800000> : vector<16xf32>
    %15 = vector.multi_reduction <maximumf>, %14, %cst_9 [1] : vector<16x8xf32> to vector<16xf32>
    %16 = vector.shape_cast %15 : vector<16xf32> to vector<16x1xf32>
    %17 = vector.broadcast %16 : vector<16x1xf32> to vector<16x8xf32>
    %18 = arith.subf %14, %17 : vector<16x8xf32>
    %19 = math.exp %18 : vector<16x8xf32>
    %cst_10 = arith.constant dense<0.000000e+00> : vector<16xf32>
    %20 = vector.multi_reduction <add>, %19, %cst_10 [1] : vector<16x8xf32> to vector<16xf32>
    %21 = vector.shape_cast %20 : vector<16xf32> to vector<16x1xf32>
    %22 = tpu.reciprocal %21 {approx = true} : vector<16x1xf32> -> vector<16x1xf32>
    %23 = vector.broadcast %22 : vector<16x1xf32> to vector<16x8xf32>
    %24 = arith.mulf %19, %23 : vector<16x8xf32>
    %25 = arith.truncf %24 : vector<16x8xf32> to vector<16x8xbf16>
    %cst_11 = arith.constant dense<0.000000e+00> : vector<16x8xf32>
    %26 = tpu.matmul %25, %13, %cst_11 {dimension_numbers = #tpu.dot_dimension_numbers<[1], [0], [0], [1], [0, 0, 1, 1], [], []>} : vector<16x8xbf16>, vector<8x8xbf16>, vector<16x8xf32> -> vector<16x8xf32>
    %c0_12 = arith.constant 0 : index
    %c0_13 = arith.constant 0 : index
    %c0_14 = arith.constant 0 : index
    %27 = vector.load %arg5[%c0_12, %c0_13, %c0_14] : memref<1x16x32xf32, #tpu.memory_space<vmem>>, vector<1x16x8xf32>
    %28 = vector.shape_cast %27 : vector<1x16x8xf32> to vector<16x8xf32>
    %29 = vector.shape_cast %26 : vector<16x8xf32> to vector<1x16x8xf32>
    tpu.vector_store %arg5[%c0_12, %c0_13, %c0_14], %29 {strides = array<i32>} : memref<1x16x32xf32, #tpu.memory_space<vmem>>, vector<1x16x8xf32>,
    %30 = vector.extract_strided_slice %3 {offsets = [0, 8], sizes = [16, 8], strides = [1, 1]} : vector<16x32xf32> to vector<16x8xf32>
    %31 = arith.truncf %30 : vector<16x8xf32> to vector<16x8xbf16>
    %32 = vector.extract_strided_slice %5 {offsets = [0, 8], sizes = [8, 8], strides = [1, 1]} : vector<8x32xf32> to vector<8x8xf32>
    %33 = arith.truncf %32 : vector<8x8xf32> to vector<8x8xbf16>
    %34 = vector.extract_strided_slice %7 {offsets = [0, 8], sizes = [8, 8], strides = [1, 1]} : vector<8x32xf32> to vector<8x8xf32>
    %35 = arith.truncf %34 : vector<8x8xf32> to vector<8x8xbf16>
    %cst_15 = arith.constant dense<0.000000e+00> : vector<16x8xf32>
    %36 = tpu.matmul %31, %33, %cst_15 {dimension_numbers = #tpu.dot_dimension_numbers<[1], [1], [0], [0], [0, 0, 1, 0], [], []>} : vector<16x8xbf16>, vector<8x8xbf16>, vector<16x8xf32> -> vector<16x8xf32>
    %cst_16 = arith.constant dense<0xFF800000> : vector<16xf32>
    %37 = vector.multi_reduction <maximumf>, %36, %cst_16 [1] : vector<16x8xf32> to vector<16xf32>
    %38 = vector.shape_cast %37 : vector<16xf32> to vector<16x1xf32>
    %39 = vector.broadcast %38 : vector<16x1xf32> to vector<16x8xf32>
    %40 = arith.subf %36, %39 : vector<16x8xf32>
    %41 = math.exp %40 : vector<16x8xf32>
    %cst_17 = arith.constant dense<0.000000e+00> : vector<16xf32>
    %42 = vector.multi_reduction <add>, %41, %cst_17 [1] : vector<16x8xf32> to vector<16xf32>
    %43 = vector.shape_cast %42 : vector<16xf32> to vector<16x1xf32>
    %44 = tpu.reciprocal %43 {approx = true} : vector<16x1xf32> -> vector<16x1xf32>
    %45 = vector.broadcast %44 : vector<16x1xf32> to vector<16x8xf32>
    %46 = arith.mulf %41, %45 : vector<16x8xf32>
    %47 = arith.truncf %46 : vector<16x8xf32> to vector<16x8xbf16>
    %cst_18 = arith.constant dense<0.000000e+00> : vector<16x8xf32>
    %48 = tpu.matmul %47, %35, %cst_18 {dimension_numbers = #tpu.dot_dimension_numbers<[1], [0], [0], [1], [0, 0, 1, 1], [], []>} : vector<16x8xbf16>, vector<8x8xbf16>, vector<16x8xf32> -> vector<16x8xf32>
    %c0_19 = arith.constant 0 : index
    %c0_20 = arith.constant 0 : index
    %c8 = arith.constant 8 : index
    %49 = vector.load %arg5[%c0_19, %c0_20, %c8] : memref<1x16x32xf32, #tpu.memory_space<vmem>>, vector<1x16x8xf32>
    %50 = vector.shape_cast %49 : vector<1x16x8xf32> to vector<16x8xf32>
    %51 = vector.shape_cast %48 : vector<16x8xf32> to vector<1x16x8xf32>
    tpu.vector_store %arg5[%c0_19, %c0_20, %c8], %51 {strides = array<i32>} : memref<1x16x32xf32, #tpu.memory_space<vmem>>, vector<1x16x8xf32>,
    %52 = vector.extract_strided_slice %3 {offsets = [0, 16], sizes = [16, 8], strides = [1, 1]} : vector<16x32xf32> to vector<16x8xf32>
    %53 = arith.truncf %52 : vector<16x8xf32> to vector<16x8xbf16>
    %54 = vector.extract_strided_slice %5 {offsets = [0, 16], sizes = [8, 8], strides = [1, 1]} : vector<8x32xf32> to vector<8x8xf32>
    %55 = arith.truncf %54 : vector<8x8xf32> to vector<8x8xbf16>
    %56 = vector.extract_strided_slice %7 {offsets = [0, 16], sizes = [8, 8], strides = [1, 1]} : vector<8x32xf32> to vector<8x8xf32>
    %57 = arith.truncf %56 : vector<8x8xf32> to vector<8x8xbf16>
    %cst_21 = arith.constant dense<0.000000e+00> : vector<16x8xf32>
    %58 = tpu.matmul %53, %55, %cst_21 {dimension_numbers = #tpu.dot_dimension_numbers<[1], [1], [0], [0], [0, 0, 1, 0], [], []>} : vector<16x8xbf16>, vector<8x8xbf16>, vector<16x8xf32> -> vector<16x8xf32>
    %cst_22 = arith.constant dense<0xFF800000> : vector<16xf32>
    %59 = vector.multi_reduction <maximumf>, %58, %cst_22 [1] : vector<16x8xf32> to vector<16xf32>
    %60 = vector.shape_cast %59 : vector<16xf32> to vector<16x1xf32>
    %61 = vector.broadcast %60 : vector<16x1xf32> to vector<16x8xf32>
    %62 = arith.subf %58, %61 : vector<16x8xf32>
    %63 = math.exp %62 : vector<16x8xf32>
    %cst_23 = arith.constant dense<0.000000e+00> : vector<16xf32>
    %64 = vector.multi_reduction <add>, %63, %cst_23 [1] : vector<16x8xf32> to vector<16xf32>
    %65 = vector.shape_cast %64 : vector<16xf32> to vector<16x1xf32>
    %66 = tpu.reciprocal %65 {approx = true} : vector<16x1xf32> -> vector<16x1xf32>
    %67 = vector.broadcast %66 : vector<16x1xf32> to vector<16x8xf32>
    %68 = arith.mulf %63, %67 : vector<16x8xf32>
    %69 = arith.truncf %68 : vector<16x8xf32> to vector<16x8xbf16>
    %cst_24 = arith.constant dense<0.000000e+00> : vector<16x8xf32>
    %70 = tpu.matmul %69, %57, %cst_24 {dimension_numbers = #tpu.dot_dimension_numbers<[1], [0], [0], [1], [0, 0, 1, 1], [], []>} : vector<16x8xbf16>, vector<8x8xbf16>, vector<16x8xf32> -> vector<16x8xf32>
    %c0_25 = arith.constant 0 : index
    %c0_26 = arith.constant 0 : index
    %c16 = arith.constant 16 : index
    %71 = vector.load %arg5[%c0_25, %c0_26, %c16] : memref<1x16x32xf32, #tpu.memory_space<vmem>>, vector<1x16x8xf32>
    %72 = vector.shape_cast %71 : vector<1x16x8xf32> to vector<16x8xf32>
    %73 = vector.shape_cast %70 : vector<16x8xf32> to vector<1x16x8xf32>
    tpu.vector_store %arg5[%c0_25, %c0_26, %c16], %73 {strides = array<i32>} : memref<1x16x32xf32, #tpu.memory_space<vmem>>, vector<1x16x8xf32>,
    %74 = vector.extract_strided_slice %3 {offsets = [0, 24], sizes = [16, 8], strides = [1, 1]} : vector<16x32xf32> to vector<16x8xf32>
    %75 = arith.truncf %74 : vector<16x8xf32> to vector<16x8xbf16>
    %76 = vector.extract_strided_slice %5 {offsets = [0, 24], sizes = [8, 8], strides = [1, 1]} : vector<8x32xf32> to vector<8x8xf32>
    %77 = arith.truncf %76 : vector<8x8xf32> to vector<8x8xbf16>
    %78 = vector.extract_strided_slice %7 {offsets = [0, 24], sizes = [8, 8], strides = [1, 1]} : vector<8x32xf32> to vector<8x8xf32>
    %79 = arith.truncf %78 : vector<8x8xf32> to vector<8x8xbf16>
    %cst_27 = arith.constant dense<0.000000e+00> : vector<16x8xf32>
    %80 = tpu.matmul %75, %77, %cst_27 {dimension_numbers = #tpu.dot_dimension_numbers<[1], [1], [0], [0], [0, 0, 1, 0], [], []>} : vector<16x8xbf16>, vector<8x8xbf16>, vector<16x8xf32> -> vector<16x8xf32>
    %cst_28 = arith.constant dense<0xFF800000> : vector<16xf32>
    %81 = vector.multi_reduction <maximumf>, %80, %cst_28 [1] : vector<16x8xf32> to vector<16xf32>
    %82 = vector.shape_cast %81 : vector<16xf32> to vector<16x1xf32>
    %83 = vector.broadcast %82 : vector<16x1xf32> to vector<16x8xf32>
    %84 = arith.subf %80, %83 : vector<16x8xf32>
    %85 = math.exp %84 : vector<16x8xf32>
    %cst_29 = arith.constant dense<0.000000e+00> : vector<16xf32>
    %86 = vector.multi_reduction <add>, %85, %cst_29 [1] : vector<16x8xf32> to vector<16xf32>
    %87 = vector.shape_cast %86 : vector<16xf32> to vector<16x1xf32>
    %88 = tpu.reciprocal %87 {approx = true} : vector<16x1xf32> -> vector<16x1xf32>
    %89 = vector.broadcast %88 : vector<16x1xf32> to vector<16x8xf32>
    %90 = arith.mulf %85, %89 : vector<16x8xf32>
    %91 = arith.truncf %90 : vector<16x8xf32> to vector<16x8xbf16>
    %cst_30 = arith.constant dense<0.000000e+00> : vector<16x8xf32>
    %92 = tpu.matmul %91, %79, %cst_30 {dimension_numbers = #tpu.dot_dimension_numbers<[1], [0], [0], [1], [0, 0, 1, 1], [], []>} : vector<16x8xbf16>, vector<8x8xbf16>, vector<16x8xf32> -> vector<16x8xf32>
    %c0_31 = arith.constant 0 : index
    %c0_32 = arith.constant 0 : index
    %c24 = arith.constant 24 : index
    %93 = vector.load %arg5[%c0_31, %c0_32, %c24] : memref<1x16x32xf32, #tpu.memory_space<vmem>>, vector<1x16x8xf32>
    %94 = vector.shape_cast %93 : vector<1x16x8xf32> to vector<16x8xf32>
    %95 = vector.shape_cast %92 : vector<16x8xf32> to vector<1x16x8xf32>
    tpu.vector_store %arg5[%c0_31, %c0_32, %c24], %95 {strides = array<i32>} : memref<1x16x32xf32, #tpu.memory_space<vmem>>, vector<1x16x8xf32>,
    return
  }
  func.func @transform_0(%arg0: i32, %arg1: i32) -> (i32, i32, i32) {
    %c0_i32 = arith.constant 0 : i32
    %c0_i32_0 = arith.constant 0 : i32
    return %arg0, %arg1, %c0_i32 : i32, i32, i32
  }
  func.func @transform_1(%arg0: i32, %arg1: i32) -> (i32, i32, i32) {
    %c0_i32 = arith.constant 0 : i32
    %c0_i32_0 = arith.constant 0 : i32
    %c0_i32_1 = arith.constant 0 : i32
    return %arg0, %c0_i32, %c0_i32_0 : i32, i32, i32
  }
  func.func @transform_2(%arg0: i32, %arg1: i32) -> (i32, i32, i32) {
    %c0_i32 = arith.constant 0 : i32
    %c0_i32_0 = arith.constant 0 : i32
    %c0_i32_1 = arith.constant 0 : i32
    return %arg0, %c0_i32, %c0_i32_0 : i32, i32, i32
  }
  func.func @transform_3(%arg0: i32, %arg1: i32) -> (i32, i32, i32) {
    %c0_i32 = arith.constant 0 : i32
    %c0_i32_0 = arith.constant 0 : i32
    return %arg0, %arg1, %c0_i32 : i32, i32, i32
  }
}

module attributes {stable_mosaic.version = 11 : i64} {
  func.func @_mm_kernel(%arg0: i32, %arg1: i32, %arg2: i32, %arg3: memref<16x32xf32, #tpu.memory_space<vmem>>, %arg4: memref<32x64xf32, #tpu.memory_space<vmem>>, %arg5: memref<16x64xf32, #tpu.memory_space<vmem>>, %arg6: memref<16x64xf32, #tpu.memory_space<vmem>>) attributes {dimension_semantics = [#tpu.dimension_semantics<parallel>, #tpu.dimension_semantics<parallel>, #tpu.dimension_semantics<arbitrary>], iteration_bounds = array<i64: 1, 1, 1>, scalar_prefetch = 0 : i64, scratch_operands = 1 : i64, tpu.core_type = #tpu.core_type<tc>, window_params = [{transform_indices = @transform_0, window_bounds = array<i64: 16, 32>}, {transform_indices = @transform_1, window_bounds = array<i64: 32, 64>}, {transform_indices = @transform_2, window_bounds = array<i64: 16, 64>}]} {
    %c0_i32 = arith.constant 0 : i32
    %0 = arith.cmpi eq, %arg2, %c0_i32 : i32
    %1 = arith.extui %0 : i1 to i32
    %c0_i32_0 = arith.constant 0 : i32
    %2 = arith.cmpi ne, %1, %c0_i32_0 : i32
    scf.if %2 {
      %cst_10 = arith.constant 0.000000e+00 : f32
      %14 = vector.broadcast %cst_10 : f32 to vector<16x64xf32>
      %c0_11 = arith.constant 0 : index
      %c0_12 = arith.constant 0 : index
      %15 = vector.load %arg6[%c0_11, %c0_12] : memref<16x64xf32, #tpu.memory_space<vmem>>, vector<16x64xf32>
      tpu.vector_store %arg6[%c0_11, %c0_12], %14 {strides = array<i32>} : memref<16x64xf32, #tpu.memory_space<vmem>>, vector<16x64xf32>,
    } else {
    }
    %c0 = arith.constant 0 : index
    %c0_1 = arith.constant 0 : index
    %3 = vector.load %arg6[%c0, %c0_1] : memref<16x64xf32, #tpu.memory_space<vmem>>, vector<16x64xf32>
    %c0_2 = arith.constant 0 : index
    %c0_3 = arith.constant 0 : index
    %4 = vector.load %arg3[%c0_2, %c0_3] : memref<16x32xf32, #tpu.memory_space<vmem>>, vector<16x32xf32>
    %5 = arith.truncf %4 : vector<16x32xf32> to vector<16x32xbf16>
    %c0_4 = arith.constant 0 : index
    %c0_5 = arith.constant 0 : index
    %6 = vector.load %arg4[%c0_4, %c0_5] : memref<32x64xf32, #tpu.memory_space<vmem>>, vector<32x64xf32>
    %7 = arith.truncf %6 : vector<32x64xf32> to vector<32x64xbf16>
    %cst = arith.constant dense<0.000000e+00> : vector<16x64xf32>
    %8 = tpu.matmul %5, %7, %cst {dimension_numbers = #tpu.dot_dimension_numbers<[1], [0], [0], [1], [0, 0, 1, 1], [], []>} : vector<16x32xbf16>, vector<32x64xbf16>, vector<16x64xf32> -> vector<16x64xf32>
    %9 = arith.addf %3, %8 : vector<16x64xf32>
    %c0_6 = arith.constant 0 : index
    %c0_7 = arith.constant 0 : index
    %10 = vector.load %arg6[%c0_6, %c0_7] : memref<16x64xf32, #tpu.memory_space<vmem>>, vector<16x64xf32>
    tpu.vector_store %arg6[%c0_6, %c0_7], %9 {strides = array<i32>} : memref<16x64xf32, #tpu.memory_space<vmem>>, vector<16x64xf32>,
    %c0_i32_8 = arith.constant 0 : i32
    %11 = arith.cmpi eq, %arg2, %c0_i32_8 : i32
    %12 = arith.extui %11 : i1 to i32
    %c0_i32_9 = arith.constant 0 : i32
    %13 = arith.cmpi ne, %12, %c0_i32_9 : i32
    scf.if %13 {
      %c0_10 = arith.constant 0 : index
      %c0_11 = arith.constant 0 : index
      %14 = vector.load %arg6[%c0_10, %c0_11] : memref<16x64xf32, #tpu.memory_space<vmem>>, vector<16x64xf32>
      %c0_12 = arith.constant 0 : index
      %c0_13 = arith.constant 0 : index
      %15 = vector.load %arg5[%c0_12, %c0_13] : memref<16x64xf32, #tpu.memory_space<vmem>>, vector<16x64xf32>
      tpu.vector_store %arg5[%c0_12, %c0_13], %14 {strides = array<i32>} : memref<16x64xf32, #tpu.memory_space<vmem>>, vector<16x64xf32>,
    } else {
    }
    return
  }
  func.func @transform_0(%arg0: i32, %arg1: i32, %arg2: i32) -> (i32, i32) {
    %c0_i32 = arith.constant 0 : i32
    return %arg0, %arg2 : i32, i32
  }
  func.func @transform_1(%arg0: i32, %arg1: i32, %arg2: i32) -> (i32, i32) {
    %c0_i32 = arith.constant 0 : i32
    return %arg2, %arg1 : i32, i32
  }
  func.func @transform_2(%arg0: i32, %arg1: i32, %arg2: i32) -> (i32, i32) {
    %c0_i32 = arith.constant 0 : i32
    return %arg0, %arg1 : i32, i32
  }
}

module attributes {stable_mosaic.version = 11 : i64} {
  func.func @_mm_bias_kernel(%arg0: i32, %arg1: i32, %arg2: i32, %arg3: memref<32x32xf32, #tpu.memory_space<vmem>>, %arg4: memref<32x32xf32, #tpu.memory_space<vmem>>, %arg5: memref<1x32xf32, #tpu.memory_space<vmem>>, %arg6: memref<32x32xf32, #tpu.memory_space<vmem>>, %arg7: memref<32x32xf32, #tpu.memory_space<vmem>>) attributes {dimension_semantics = [#tpu.dimension_semantics<parallel>, #tpu.dimension_semantics<parallel>, #tpu.dimension_semantics<arbitrary>], iteration_bounds = array<i64: 1, 1, 1>, scalar_prefetch = 0 : i64, scratch_operands = 1 : i64, tpu.core_type = #tpu.core_type<tc>, window_params = [{transform_indices = @transform_0, window_bounds = array<i64: 32, 32>}, {transform_indices = @transform_1, window_bounds = array<i64: 32, 32>}, {transform_indices = @transform_2, window_bounds = array<i64: 1, 32>}, {transform_indices = @transform_3, window_bounds = array<i64: 32, 32>}]} {
    %c0_i32 = arith.constant 0 : i32
    %0 = arith.cmpi eq, %arg2, %c0_i32 : i32
    %1 = arith.extui %0 : i1 to i32
    %c0_i32_0 = arith.constant 0 : i32
    %2 = arith.cmpi ne, %1, %c0_i32_0 : i32
    scf.if %2 {
      %cst_10 = arith.constant 0.000000e+00 : f32
      %14 = vector.broadcast %cst_10 : f32 to vector<32x32xf32>
      %c0_11 = arith.constant 0 : index
      %c0_12 = arith.constant 0 : index
      %15 = vector.load %arg7[%c0_11, %c0_12] : memref<32x32xf32, #tpu.memory_space<vmem>>, vector<32x32xf32>
      tpu.vector_store %arg7[%c0_11, %c0_12], %14 {strides = array<i32>} : memref<32x32xf32, #tpu.memory_space<vmem>>, vector<32x32xf32>,
    } else {
    }
    %c0 = arith.constant 0 : index
    %c0_1 = arith.constant 0 : index
    %3 = vector.load %arg7[%c0, %c0_1] : memref<32x32xf32, #tpu.memory_space<vmem>>, vector<32x32xf32>
    %c0_2 = arith.constant 0 : index
    %c0_3 = arith.constant 0 : index
    %4 = vector.load %arg3[%c0_2, %c0_3] : memref<32x32xf32, #tpu.memory_space<vmem>>, vector<32x32xf32>
    %5 = arith.truncf %4 : vector<32x32xf32> to vector<32x32xbf16>
    %c0_4 = arith.constant 0 : index
    %c0_5 = arith.constant 0 : index
    %6 = vector.load %arg4[%c0_4, %c0_5] : memref<32x32xf32, #tpu.memory_space<vmem>>, vector<32x32xf32>
    %7 = arith.truncf %6 : vector<32x32xf32> to vector<32x32xbf16>
    %cst = arith.constant dense<0.000000e+00> : vector<32x32xf32>
    %8 = tpu.matmul %5, %7, %cst {dimension_numbers = #tpu.dot_dimension_numbers<[1], [0], [0], [1], [0, 0, 1, 1], [], []>} : vector<32x32xbf16>, vector<32x32xbf16>, vector<32x32xf32> -> vector<32x32xf32>
    %9 = arith.addf %3, %8 : vector<32x32xf32>
    %c0_6 = arith.constant 0 : index
    %c0_7 = arith.constant 0 : index
    %10 = vector.load %arg7[%c0_6, %c0_7] : memref<32x32xf32, #tpu.memory_space<vmem>>, vector<32x32xf32>
    tpu.vector_store %arg7[%c0_6, %c0_7], %9 {strides = array<i32>} : memref<32x32xf32, #tpu.memory_space<vmem>>, vector<32x32xf32>,
    %c0_i32_8 = arith.constant 0 : i32
    %11 = arith.cmpi eq, %arg2, %c0_i32_8 : i32
    %12 = arith.extui %11 : i1 to i32
    %c0_i32_9 = arith.constant 0 : i32
    %13 = arith.cmpi ne, %12, %c0_i32_9 : i32
    scf.if %13 {
      %c0_10 = arith.constant 0 : index
      %c0_11 = arith.constant 0 : index
      %14 = vector.load %arg7[%c0_10, %c0_11] : memref<32x32xf32, #tpu.memory_space<vmem>>, vector<32x32xf32>
      %c0_12 = arith.constant 0 : index
      %c0_13 = arith.constant 0 : index
      %15 = vector.load %arg5[%c0_12, %c0_13] : memref<1x32xf32, #tpu.memory_space<vmem>>, vector<1x32xf32>
      %16 = vector.broadcast %15 : vector<1x32xf32> to vector<32x32xf32>
      %17 = arith.addf %14, %16 : vector<32x32xf32>
      %c0_14 = arith.constant 0 : index
      %c0_15 = arith.constant 0 : index
      %18 = vector.load %arg6[%c0_14, %c0_15] : memref<32x32xf32, #tpu.memory_space<vmem>>, vector<32x32xf32>
      tpu.vector_store %arg6[%c0_14, %c0_15], %17 {strides = array<i32>} : memref<32x32xf32, #tpu.memory_space<vmem>>, vector<32x32xf32>,
    } else {
    }
    return
  }
  func.func @transform_0(%arg0: i32, %arg1: i32, %arg2: i32) -> (i32, i32) {
    %c0_i32 = arith.constant 0 : i32
    return %arg0, %arg2 : i32, i32
  }
  func.func @transform_1(%arg0: i32, %arg1: i32, %arg2: i32) -> (i32, i32) {
    %c0_i32 = arith.constant 0 : i32
    return %arg2, %arg1 : i32, i32
  }
  func.func @transform_2(%arg0: i32, %arg1: i32, %arg2: i32) -> (i32, i32) {
    %c0_i32 = arith.constant 0 : i32
    %c0_i32_0 = arith.constant 0 : i32
    return %c0_i32, %arg1 : i32, i32
  }
  func.func @transform_3(%arg0: i32, %arg1: i32, %arg2: i32) -> (i32, i32) {
    %c0_i32 = arith.constant 0 : i32
    return %arg0, %arg1 : i32, i32
  }
}

</mosaic_0001>

<llo_original>
// kernel: lora_ip_attn_forward.4
$region0: #{lora_ip_attn_forward.4}
  #allocation0 [shape = 'u32[]', space=smem, size = 0x4, offset = 0x4, fixed_abs, tag = 'smem constant byte address 0x4 - core index']
  #allocation1 [shape = 'u32[144,128]{1,0:T(1,128)}', space=vmem, size = 0x12000, scoped, tag = 'internal scratch']
  #allocation2 [shape = 'f32[32,32]{1,0:T(8,128)}', space=vmem, size = 0x4000, scoped, tag = 'scratch operand']
  %s0 = inlined_call_operand.vmem [shape: f32[32,32], index: 0, kind: input, shape index: {}]
  %s1 = inlined_call_operand.vmem [shape: f32[32,32], index: 1, kind: input, shape index: {}]
  %s2 = inlined_call_operand.vmem [shape: f32[32,32], index: 2, kind: output, shape index: {}]
  %s3 = sld [smem:[#allocation0]]
  $region26: #{lora_ip_attn_forward.4} parent=0
    _
  %s5 = ssub.s32 1, %s3
  %s6 = scalar_select 0, %s5, %s3
  // Predicated region
  $region2: #{lora_ip_attn_forward.4} parent=0 // pred_check
    _
  $region3: #{lora_ip_attn_forward.4} parent=0 // pred_check_branch
    %8 = sbr.rel (0) target = $region5
  $region4: #{lora_ip_attn_forward.4} parent=0 // pred_region
    _
  $region5: #{lora_ip_attn_forward.4} parent=0 // pred_fallthru
    _
  // Predicated region
  $region6: #{lora_ip_attn_forward.4} parent=0 // pred_check
    _
  $region7: #{lora_ip_attn_forward.4} parent=0 // pred_check_branch
    %10 = sbr.rel (0) target = $region9
  $region8: #{lora_ip_attn_forward.4} parent=0 // pred_region
    _
  $region9: #{lora_ip_attn_forward.4} parent=0 // pred_fallthru
    _
  %p12 = scmp.eq.s32.totalorder 0, 0
  // Predicated region
  $region10: #{lora_ip_attn_forward.4} parent=0 // pred_check
    %p13 = pneg %p12
  $region11: #{lora_ip_attn_forward.4} parent=0 // pred_check_branch
    %15 = sbr.rel (%p13) target = $region13
  $region12: #{lora_ip_attn_forward.4} parent=0 // pred_region
    %vm16 = vcmask 261120
    %17 = vst.msk [vmem:[#allocation2] sm:$0xff] %vm16, 0.0
    %18 = vst.msk [vmem:[#allocation2 + $0x8] sm:$0xff] %vm16, 0.0
    %19 = vst.msk [vmem:[#allocation2 + $0x10] sm:$0xff] %vm16, 0.0
    %20 = vst.msk [vmem:[#allocation2 + $0x18] sm:$0xff] %vm16, 0.0
  $region13: #{lora_ip_attn_forward.4} parent=0 // pred_fallthru
    _
  %v21 = vld [vmem:[#allocation2] sm:$0xff]
  %v22 = vld [vmem:[#allocation2 + $0x8] sm:$0xff]
  %v23 = vld [vmem:[#allocation2 + $0x10] sm:$0xff]
  %v24 = vld [vmem:[#allocation2 + $0x18] sm:$0xff]
  %v25 = vld [vmem:[%s0] sm:$0xff]
  %v26 = vld [vmem:[%s0 + $0x8] sm:$0xff]
  %v27 = vld [vmem:[%s0 + $0x10] sm:$0xff]
  %v28 = vld [vmem:[%s0 + $0x18] sm:$0xff]
  %v29 = vpack.c.bf16 %v26, %v25
  %v30 = vpack.c.bf16 %v28, %v27
  %v31 = vld [vmem:[%s1] sm:$0xff]
  %v32 = vld [vmem:[%s1 + $0x8] sm:$0xff]
  %v33 = vld [vmem:[%s1 + $0x10] sm:$0xff]
  %v34 = vld [vmem:[%s1 + $0x18] sm:$0xff]
  %v35 = vpack.c.bf16 %v32, %v31
  %v36 = vpack.c.bf16 %v34, %v33
  %vm37 = vcmask 261120
  %v39 = vsel %vm37, %v29, 0
  %v42 = vsel %vm37, %v30, 0
  %44 = vmatprep.subr.bf16.mxu0 0
  %45 = vmatpush1.bf16.msra.mxu0 0
  %46 = vmatprep.subr.bf16.mxu0 0
  %47 = vmatpush1.bf16.msra.mxu0 0
  %48 = vmatprep.subr.bf16.mxu0 0
  %49 = vmatpush1.bf16.msra.mxu0 0
  %50 = vmatprep.subr.bf16.mxu0 0
  %51 = vmatpush1.bf16.msra.mxu0 0
  %52 = vmatprep.subr.bf16.mxu0 0
  %53 = vmatpush1.bf16.msra.mxu0 0
  %54 = vmatprep.subr.bf16.mxu0 0
  %55 = vmatpush1.bf16.msra.mxu0 0
  %56 = vmatprep.subr.bf16.mxu0 0
  %57 = vmatpush1.bf16.msra.mxu0 %v36
  %58 = vmatprep.subr.bf16.mxu0 0
  %59 = vmatpush1.bf16.msra.mxu0 %v35
  %60 = vmatprep.subr.bf16.mxu0 0
  %61 = vmatpush2.bf16.msra.mxu0 0
  %62 = vmatprep.subr.bf16.mxu0 0
  %63 = vmatpush2.bf16.msra.mxu0 0
  %64 = vmatprep.subr.bf16.mxu0 0
  %65 = vmatpush2.bf16.msra.mxu0 0
  %66 = vmatprep.subr.bf16.mxu0 0
  %67 = vmatpush2.bf16.msra.mxu0 0
  %68 = vmatprep.subr.bf16.mxu0 0
  %69 = vmatpush2.bf16.msra.mxu0 0
  %70 = vmatprep.subr.bf16.mxu0 0
  %71 = vmatpush2.bf16.msra.mxu0 0
  %72 = vmatprep.subr.bf16.mxu0 0
  %73 = vmatpush2.bf16.msra.mxu0 0
  %74 = vmatprep.subr.bf16.mxu0 0
  %75 = vmatpush2.bf16.msra.mxu0 0
  %76 = vmatprep.mubr.bf16.mxu0 0
  %77 = vmatmul.mubr.bf16.gmra.mxu0 %v39
  %v78 = vpop.f32.mrf.mxu0
  %v79 = vadd.f32 0.0, %v78
  %v80 = vpop.f32.mrf.mxu0
  %v81 = vpop.f32.mrf.mxu0
  %v82 = vadd.f32 0.0, %v81
  %v83 = vpop.f32.mrf.mxu0
  %84 = vmatprep.mubr.bf16.mxu0 0
  %85 = vmatmul.mubr.bf16.gmra.mxu0 %v42
  %v86 = vpop.f32.mrf.mxu0
  %v87 = vadd.f32 0.0, %v86
  %v88 = vpop.f32.mrf.mxu0
  %v89 = vpop.f32.mrf.mxu0
  %v90 = vadd.f32 0.0, %v89
  %v91 = vpop.f32.mrf.mxu0
  %92 = vdwg.mxu0
  %v93 = vadd.f32 %v21, %v79
  %v94 = vadd.f32 %v22, %v82
  %v95 = vadd.f32 %v23, %v87
  %v96 = vadd.f32 %v24, %v90
  %97 = vst.msk [vmem:[#allocation2] sm:$0xff] %vm37, %v93
  %98 = vst.msk [vmem:[#allocation2 + $0x8] sm:$0xff] %vm37, %v94
  %99 = vst.msk [vmem:[#allocation2 + $0x10] sm:$0xff] %vm37, %v95
  %100 = vst.msk [vmem:[#allocation2 + $0x18] sm:$0xff] %vm37, %v96
  // Predicated region
  $region14: #{lora_ip_attn_forward.4} parent=0 // pred_check
    %p101 = pneg %p12
  $region15: #{lora_ip_attn_forward.4} parent=0 // pred_check_branch
    %103 = sbr.rel (%p101) target = $region17
  $region16: #{lora_ip_attn_forward.4} parent=0 // pred_region
    %v104 = vld [vmem:[#allocation2] sm:$0xff]
    %v105 = vld [vmem:[#allocation2 + $0x8] sm:$0xff]
    %v106 = vld [vmem:[#allocation2 + $0x10] sm:$0xff]
    %v107 = vld [vmem:[#allocation2 + $0x18] sm:$0xff]
    %108 = vst.msk [vmem:[%s2] sm:$0xff] %vm37, %v104
    %109 = vst.msk [vmem:[%s2 + $0x8] sm:$0xff] %vm37, %v105
    %110 = vst.msk [vmem:[%s2 + $0x10] sm:$0xff] %vm37, %v106
    %111 = vst.msk [vmem:[%s2 + $0x18] sm:$0xff] %vm37, %v107
  $region17: #{lora_ip_attn_forward.4} parent=0 // pred_fallthru
    _
  // Predicated region
  $region18: #{lora_ip_attn_forward.4} parent=0 // pred_check
    _
  $region19: #{lora_ip_attn_forward.4} parent=0 // pred_check_branch
    %113 = sbr.rel (0) target = $region21
  $region20: #{lora_ip_attn_forward.4} parent=0 // pred_region
    _
  $region21: #{lora_ip_attn_forward.4} parent=0 // pred_fallthru
    _
  // Predicated region
  $region22: #{lora_ip_attn_forward.4} parent=0 // pred_check
    _
  $region23: #{lora_ip_attn_forward.4} parent=0 // pred_check_branch
    %115 = sbr.rel (0) target = $region25
  $region24: #{lora_ip_attn_forward.4} parent=0 // pred_region
    _
  $region25: #{lora_ip_attn_forward.4} parent=0 // pred_fallthru
    _

// kernel: lora_ip_attn_forward.5
$region0: #{lora_ip_attn_forward.5}
  #allocation0 [shape = 'u32[]', space=smem, size = 0x4, offset = 0x4, fixed_abs, tag = 'smem constant byte address 0x4 - core index']
  #allocation1 [shape = 'u32[144,128]{1,0:T(1,128)}', space=vmem, size = 0x12000, scoped, tag = 'internal scratch']
  #allocation2 [shape = 'f32[16,64]{1,0:T(8,128)}', space=vmem, size = 0x2000, scoped, tag = 'scratch operand']
  %s0 = inlined_call_operand.hbm [shape: f32[16,32], index: 0, kind: input, shape index: {}]
  %s1 = inlined_call_operand.hbm [shape: f32[32,64], index: 1, kind: input, shape index: {}]
  %s2 = inlined_call_operand.vmem [shape: f32[16,64], index: 2, kind: output, shape index: {}]
  %s3 = sld [smem:[#allocation0]]
  $region34: #{lora_ip_attn_forward.5} parent=0
    _
  %s5 = ssub.s32 1, %s3
  %s6 = scalar_select 0, %s5, %s3
  $region1: #{lora_ip_attn_forward.5} parent=0
    #allocation3 [shape = 'u8[8192]{0}', space=vmem, size = 0x2000, scoped, tag = 'input window, operand 0, single buffered']
    #allocation4 [shape = 's32[1]{0}', space=sflag, size = 0x4, scoped, tag = 'scoped memory for lora_ip_attn_forward.5']
    #allocation5 [shape = 'u8[16384]{0}', space=vmem, size = 0x4000, scoped, tag = 'input window, operand 1, single buffered']
    #allocation6 [shape = 's32[1]{0}', space=sflag, size = 0x4, scoped, tag = 'scoped memory for lora_ip_attn_forward.5']
    %7 = vsyncpa [#allocation4], 0
    %8 = vsyncpa [#allocation6], 0
    // Predicated region
    $region2: #{lora_ip_attn_forward.5} parent=1 // pred_check
      _
    $region3: #{lora_ip_attn_forward.5} parent=1 // pred_check_branch
      %10 = sbr.rel (0) target = $region5
    $region4: #{lora_ip_attn_forward.5} parent=1 // pred_region
      %s12 = ssub.s32 256, 256
      %13 = vsyncadd [#allocation4], %s12
      %s14 = sshll.u32 [#allocation3], 4
      %s15 = int_to_ptr.vmem [resolvable:$true] %s14
      %20 = dma.hbm_to_vmem [thread:$0]  %s0, 256, %s15, [#allocation4], 128, 128, 8
    $region5: #{lora_ip_attn_forward.5} parent=1 // pred_fallthru
      _
    // Predicated region
    $region6: #{lora_ip_attn_forward.5} parent=1 // pred_check
      _
    $region7: #{lora_ip_attn_forward.5} parent=1 // pred_check_branch
      %22 = sbr.rel (0) target = $region9
    $region8: #{lora_ip_attn_forward.5} parent=1 // pred_region
      %s24 = ssub.s32 512, 512
      %25 = vsyncadd [#allocation6], %s24
      %s26 = sshll.u32 [#allocation5], 4
      %s27 = int_to_ptr.vmem [resolvable:$true] %s26
      %32 = dma.hbm_to_vmem [thread:$0]  %s1, 512, %s27, [#allocation6], 128, 128, 8
    $region9: #{lora_ip_attn_forward.5} parent=1 // pred_fallthru
      _
    // Predicated region
    $region10: #{lora_ip_attn_forward.5} parent=1 // pred_check
      _
    $region11: #{lora_ip_attn_forward.5} parent=1 // pred_check_branch
      %34 = sbr.rel (0) target = $region13
    $region12: #{lora_ip_attn_forward.5} parent=1 // pred_region
      %35 = dma.done [#allocation4], 256
    $region13: #{lora_ip_attn_forward.5} parent=1 // pred_fallthru
      _
    // Predicated region
    $region14: #{lora_ip_attn_forward.5} parent=1 // pred_check
      _
    $region15: #{lora_ip_attn_forward.5} parent=1 // pred_check_branch
      %37 = sbr.rel (0) target = $region17
    $region16: #{lora_ip_attn_forward.5} parent=1 // pred_region
      %38 = dma.done [#allocation6], 512
    $region17: #{lora_ip_attn_forward.5} parent=1 // pred_fallthru
      _
    %p40 = scmp.eq.s32.totalorder 0, 0
    // Predicated region
    $region18: #{lora_ip_attn_forward.5} parent=1 // pred_check
      %p41 = pneg %p40
    $region19: #{lora_ip_attn_forward.5} parent=1 // pred_check_branch
      %43 = sbr.rel (%p41) target = $region21
    $region20: #{lora_ip_attn_forward.5} parent=1 // pred_region
      %vm44 = vcmask 523264
      %45 = vst.msk [vmem:[#allocation2] sm:$0xff] %vm44, 0.0
      %46 = vst.msk [vmem:[#allocation2 + $0x8] sm:$0xff] %vm44, 0.0
    $region21: #{lora_ip_attn_forward.5} parent=1 // pred_fallthru
      _
    %v47 = vld [vmem:[#allocation2] sm:$0xff]
    %v48 = vld [vmem:[#allocation2 + $0x8] sm:$0xff]
    %v49 = vld [vmem:[#allocation3] sm:$0xff]
    %v50 = vld [vmem:[#allocation3 + $0x8] sm:$0xff]
    %v51 = vpack.c.bf16 %v50, %v49
    %v52 = vld [vmem:[#allocation5] sm:$0xff]
    %v53 = vld [vmem:[#allocation5 + $0x8] sm:$0xff]
    %v54 = vld [vmem:[#allocation5 + $0x10] sm:$0xff]
    %v55 = vld [vmem:[#allocation5 + $0x18] sm:$0xff]
    %v56 = vpack.c.bf16 %v53, %v52
    %v57 = vpack.c.bf16 %v55, %v54
    %vm58 = vcmask 261120
    %v60 = vsel %vm58, %v51, 0
    %62 = vmatprep.subr.bf16.mxu0 0
    %63 = vmatpush1.bf16.msra.mxu0 0
    %64 = vmatprep.subr.bf16.mxu0 0
    %65 = vmatpush1.bf16.msra.mxu0 0
    %66 = vmatprep.subr.bf16.mxu0 0
    %67 = vmatpush1.bf16.msra.mxu0 0
    %68 = vmatprep.subr.bf16.mxu0 0
    %69 = vmatpush1.bf16.msra.mxu0 0
    %70 = vmatprep.subr.bf16.mxu0 0
    %71 = vmatpush1.bf16.msra.mxu0 0
    %72 = vmatprep.subr.bf16.mxu0 0
    %73 = vmatpush1.bf16.msra.mxu0 0
    %74 = vmatprep.subr.bf16.mxu0 0
    %75 = vmatpush1.bf16.msra.mxu0 %v57
    %76 = vmatprep.subr.bf16.mxu0 0
    %77 = vmatpush1.bf16.msra.mxu0 %v56
    %78 = vmatprep.subr.bf16.mxu0 0
    %79 = vmatpush2.bf16.msra.mxu0 0
    %80 = vmatprep.subr.bf16.mxu0 0
    %81 = vmatpush2.bf16.msra.mxu0 0
    %82 = vmatprep.subr.bf16.mxu0 0
    %83 = vmatpush2.bf16.msra.mxu0 0
    %84 = vmatprep.subr.bf16.mxu0 0
    %85 = vmatpush2.bf16.msra.mxu0 0
    %86 = vmatprep.subr.bf16.mxu0 0
    %87 = vmatpush2.bf16.msra.mxu0 0
    %88 = vmatprep.subr.bf16.mxu0 0
    %89 = vmatpush2.bf16.msra.mxu0 0
    %90 = vmatprep.subr.bf16.mxu0 0
    %91 = vmatpush2.bf16.msra.mxu0 0
    %92 = vmatprep.subr.bf16.mxu0 0
    %93 = vmatpush2.bf16.msra.mxu0 0
    %94 = vmatprep.mubr.bf16.mxu0 0
    %95 = vmatmul.mubr.bf16.gmra.mxu0 %v60
    %v96 = vpop.f32.mrf.mxu0
    %v97 = vadd.f32 0.0, %v96
    %v98 = vpop.f32.mrf.mxu0
    %v99 = vpop.f32.mrf.mxu0
    %v100 = vadd.f32 0.0, %v99
    %v101 = vpop.f32.mrf.mxu0
    %102 = vdwg.mxu0
    %v103 = vadd.f32 %v47, %v97
    %v104 = vadd.f32 %v48, %v100
    %vm105 = vcmask 523264
    %106 = vst.msk [vmem:[#allocation2] sm:$0xff] %vm105, %v103
    %107 = vst.msk [vmem:[#allocation2 + $0x8] sm:$0xff] %vm105, %v104
    // Predicated region
    $region22: #{lora_ip_attn_forward.5} parent=1 // pred_check
      %p108 = pneg %p40
    $region23: #{lora_ip_attn_forward.5} parent=1 // pred_check_branch
      %110 = sbr.rel (%p108) target = $region25
    $region24: #{lora_ip_attn_forward.5} parent=1 // pred_region
      %v111 = vld [vmem:[#allocation2] sm:$0xff]
      %v112 = vld [vmem:[#allocation2 + $0x8] sm:$0xff]
      %113 = vst.msk [vmem:[%s2] sm:$0xff] %vm105, %v111
      %114 = vst.msk [vmem:[%s2 + $0x8] sm:$0xff] %vm105, %v112
    $region25: #{lora_ip_attn_forward.5} parent=1 // pred_fallthru
      _
    // Predicated region
    $region26: #{lora_ip_attn_forward.5} parent=1 // pred_check
      _
    $region27: #{lora_ip_attn_forward.5} parent=1 // pred_check_branch
      %116 = sbr.rel (0) target = $region29
    $region28: #{lora_ip_attn_forward.5} parent=1 // pred_region
      _
    $region29: #{lora_ip_attn_forward.5} parent=1 // pred_fallthru
      _
    // Predicated region
    $region30: #{lora_ip_attn_forward.5} parent=1 // pred_check
      _
    $region31: #{lora_ip_attn_forward.5} parent=1 // pred_check_branch
      %118 = sbr.rel (0) target = $region33
    $region32: #{lora_ip_attn_forward.5} parent=1 // pred_region
      _
    $region33: #{lora_ip_attn_forward.5} parent=1 // pred_fallthru
      _
    %119 = vsyncpa [#allocation4], 1
    %120 = vsyncpa [#allocation6], 1

// kernel: lora_ip_attn_forward.7
$region0: #{lora_ip_attn_forward.7}
  #allocation0 [shape = 'u32[]', space=smem, size = 0x4, offset = 0x4, fixed_abs, tag = 'smem constant byte address 0x4 - core index']
  #allocation1 [shape = 'u32[144,128]{1,0:T(1,128)}', space=vmem, size = 0x12000, scoped, tag = 'internal scratch']
  #allocation2 [shape = 'f32[32,32]{1,0:T(8,128)}', space=vmem, size = 0x4000, scoped, tag = 'scratch operand']
  %s0 = inlined_call_operand.vmem [shape: f32[32,32], index: 0, kind: input, shape index: {}]
  %s1 = inlined_call_operand.vmem [shape: f32[32,32], index: 1, kind: input, shape index: {}]
  %s2 = inlined_call_operand.vmem [shape: f32[1,32], index: 2, kind: input, shape index: {}]
  %s3 = inlined_call_operand.hbm [shape: f32[32,32], index: 3, kind: output, shape index: {}]
  %s4 = sld [smem:[#allocation0]]
  $region30: #{lora_ip_attn_forward.7} parent=0
    _
  %s6 = ssub.s32 1, %s4
  %s7 = scalar_select 0, %s6, %s4
  $region1: #{lora_ip_attn_forward.7} parent=0
    #allocation3 [shape = 'u8[16384]{0}', space=vmem, size = 0x4000, scoped, tag = 'output window, operand 0, single buffered']
    #allocation4 [shape = 's32[1]{0}', space=sflag, size = 0x4, scoped, tag = 'scoped memory for lora_ip_attn_forward.7']
    %8 = vsyncpa [#allocation4], 0
    // Predicated region
    $region2: #{lora_ip_attn_forward.7} parent=1 // pred_check
      _
    $region3: #{lora_ip_attn_forward.7} parent=1 // pred_check_branch
      %10 = sbr.rel (0) target = $region5
    $region4: #{lora_ip_attn_forward.7} parent=1 // pred_region
      _
    $region5: #{lora_ip_attn_forward.7} parent=1 // pred_fallthru
      _
    // Predicated region
    $region6: #{lora_ip_attn_forward.7} parent=1 // pred_check
      _
    $region7: #{lora_ip_attn_forward.7} parent=1 // pred_check_branch
      %12 = sbr.rel (0) target = $region9
    $region8: #{lora_ip_attn_forward.7} parent=1 // pred_region
      _
    $region9: #{lora_ip_attn_forward.7} parent=1 // pred_fallthru
      _
    // Predicated region
    $region10: #{lora_ip_attn_forward.7} parent=1 // pred_check
      _
    $region11: #{lora_ip_attn_forward.7} parent=1 // pred_check_branch
      %14 = sbr.rel (0) target = $region13
    $region12: #{lora_ip_attn_forward.7} parent=1 // pred_region
      _
    $region13: #{lora_ip_attn_forward.7} parent=1 // pred_fallthru
      _
    %p16 = scmp.eq.s32.totalorder 0, 0
    // Predicated region
    $region14: #{lora_ip_attn_forward.7} parent=1 // pred_check
      %p17 = pneg %p16
    $region15: #{lora_ip_attn_forward.7} parent=1 // pred_check_branch
      %19 = sbr.rel (%p17) target = $region17
    $region16: #{lora_ip_attn_forward.7} parent=1 // pred_region
      %vm20 = vcmask 261120
      %21 = vst.msk [vmem:[#allocation2] sm:$0xff] %vm20, 0.0
      %22 = vst.msk [vmem:[#allocation2 + $0x8] sm:$0xff] %vm20, 0.0
      %23 = vst.msk [vmem:[#allocation2 + $0x10] sm:$0xff] %vm20, 0.0
      %24 = vst.msk [vmem:[#allocation2 + $0x18] sm:$0xff] %vm20, 0.0
    $region17: #{lora_ip_attn_forward.7} parent=1 // pred_fallthru
      _
    %v25 = vld [vmem:[#allocation2] sm:$0xff]
    %v26 = vld [vmem:[#allocation2 + $0x8] sm:$0xff]
    %v27 = vld [vmem:[#allocation2 + $0x10] sm:$0xff]
    %v28 = vld [vmem:[#allocation2 + $0x18] sm:$0xff]
    %v29 = vld [vmem:[%s0] sm:$0xff]
    %v30 = vld [vmem:[%s0 + $0x8] sm:$0xff]
    %v31 = vld [vmem:[%s0 + $0x10] sm:$0xff]
    %v32 = vld [vmem:[%s0 + $0x18] sm:$0xff]
    %v33 = vpack.c.bf16 %v30, %v29
    %v34 = vpack.c.bf16 %v32, %v31
    %v35 = vld [vmem:[%s1] sm:$0xff]
    %v36 = vld [vmem:[%s1 + $0x8] sm:$0xff]
    %v37 = vld [vmem:[%s1 + $0x10] sm:$0xff]
    %v38 = vld [vmem:[%s1 + $0x18] sm:$0xff]
    %v39 = vpack.c.bf16 %v36, %v35
    %v40 = vpack.c.bf16 %v38, %v37
    %vm41 = vcmask 261120
    %v43 = vsel %vm41, %v33, 0
    %v46 = vsel %vm41, %v34, 0
    %48 = vmatprep.subr.bf16.mxu0 0
    %49 = vmatpush1.bf16.msra.mxu0 0
    %50 = vmatprep.subr.bf16.mxu0 0
    %51 = vmatpush1.bf16.msra.mxu0 0
    %52 = vmatprep.subr.bf16.mxu0 0
    %53 = vmatpush1.bf16.msra.mxu0 0
    %54 = vmatprep.subr.bf16.mxu0 0
    %55 = vmatpush1.bf16.msra.mxu0 0
    %56 = vmatprep.subr.bf16.mxu0 0
    %57 = vmatpush1.bf16.msra.mxu0 0
    %58 = vmatprep.subr.bf16.mxu0 0
    %59 = vmatpush1.bf16.msra.mxu0 0
    %60 = vmatprep.subr.bf16.mxu0 0
    %61 = vmatpush1.bf16.msra.mxu0 %v40
    %62 = vmatprep.subr.bf16.mxu0 0
    %63 = vmatpush1.bf16.msra.mxu0 %v39
    %64 = vmatprep.subr.bf16.mxu0 0
    %65 = vmatpush2.bf16.msra.mxu0 0
    %66 = vmatprep.subr.bf16.mxu0 0
    %67 = vmatpush2.bf16.msra.mxu0 0
    %68 = vmatprep.subr.bf16.mxu0 0
    %69 = vmatpush2.bf16.msra.mxu0 0
    %70 = vmatprep.subr.bf16.mxu0 0
    %71 = vmatpush2.bf16.msra.mxu0 0
    %72 = vmatprep.subr.bf16.mxu0 0
    %73 = vmatpush2.bf16.msra.mxu0 0
    %74 = vmatprep.subr.bf16.mxu0 0
    %75 = vmatpush2.bf16.msra.mxu0 0
    %76 = vmatprep.subr.bf16.mxu0 0
    %77 = vmatpush2.bf16.msra.mxu0 0
    %78 = vmatprep.subr.bf16.mxu0 0
    %79 = vmatpush2.bf16.msra.mxu0 0
    %80 = vmatprep.mubr.bf16.mxu0 0
    %81 = vmatmul.mubr.bf16.gmra.mxu0 %v43
    %v82 = vpop.f32.mrf.mxu0
    %v83 = vadd.f32 0.0, %v82
    %v84 = vpop.f32.mrf.mxu0
    %v85 = vpop.f32.mrf.mxu0
    %v86 = vadd.f32 0.0, %v85
    %v87 = vpop.f32.mrf.mxu0
    %88 = vmatprep.mubr.bf16.mxu0 0
    %89 = vmatmul.mubr.bf16.gmra.mxu0 %v46
    %v90 = vpop.f32.mrf.mxu0
    %v91 = vadd.f32 0.0, %v90
    %v92 = vpop.f32.mrf.mxu0
    %v93 = vpop.f32.mrf.mxu0
    %v94 = vadd.f32 0.0, %v93
    %v95 = vpop.f32.mrf.mxu0
    %96 = vdwg.mxu0
    %v97 = vadd.f32 %v25, %v83
    %v98 = vadd.f32 %v26, %v86
    %v99 = vadd.f32 %v27, %v91
    %v100 = vadd.f32 %v28, %v94
    %101 = vst.msk [vmem:[#allocation2] sm:$0xff] %vm41, %v97
    %102 = vst.msk [vmem:[#allocation2 + $0x8] sm:$0xff] %vm41, %v98
    %103 = vst.msk [vmem:[#allocation2 + $0x10] sm:$0xff] %vm41, %v99
    %104 = vst.msk [vmem:[#allocation2 + $0x18] sm:$0xff] %vm41, %v100
    // Predicated region
    $region18: #{lora_ip_attn_forward.7} parent=1 // pred_check
      %p105 = pneg %p16
    $region19: #{lora_ip_attn_forward.7} parent=1 // pred_check_branch
      %107 = sbr.rel (%p105) target = $region21
    $region20: #{lora_ip_attn_forward.7} parent=1 // pred_region
      %v108 = vld [vmem:[#allocation2] sm:$0xff]
      %v109 = vld [vmem:[#allocation2 + $0x8] sm:$0xff]
      %v110 = vld [vmem:[#allocation2 + $0x10] sm:$0xff]
      %v111 = vld [vmem:[#allocation2 + $0x18] sm:$0xff]
      %v112 = vld [vmem:[%s2] sm:$0x1]
      %v114 = vlaneseq
      %v115 = vshrl.u32 %v114, 7
      %v116 = vsub.s32 0, %v115
      %v117 = vrot.slane %v112, %v116
      %v119 = vadd.f32 %v108, %v117
      %v120 = vadd.f32 %v109, %v117
      %v121 = vadd.f32 %v110, %v117
      %v122 = vadd.f32 %v111, %v117
      %123 = vst.msk [vmem:[#allocation3] sm:$0xff] %vm41, %v119
      %124 = vst.msk [vmem:[#allocation3 + $0x8] sm:$0xff] %vm41, %v120
      %125 = vst.msk [vmem:[#allocation3 + $0x10] sm:$0xff] %vm41, %v121
      %126 = vst.msk [vmem:[#allocation3 + $0x18] sm:$0xff] %vm41, %v122
    $region21: #{lora_ip_attn_forward.7} parent=1 // pred_fallthru
      _
    // Predicated region
    $region22: #{lora_ip_attn_forward.7} parent=1 // pred_check
      _
    $region23: #{lora_ip_attn_forward.7} parent=1 // pred_check_branch
      %128 = sbr.rel (0) target = $region25
    $region24: #{lora_ip_attn_forward.7} parent=1 // pred_region
      %s130 = ssub.s32 512, 512
      %131 = vsyncadd [#allocation4], %s130
      %s132 = sshll.u32 [#allocation3], 4
      %s133 = int_to_ptr.vmem [resolvable:$true] %s132
      %138 = dma.vmem_to_hbm [thread:$0]  %s133, 512, %s3, [#allocation4], 128, 128, 8
    $region25: #{lora_ip_attn_forward.7} parent=1 // pred_fallthru
      _
    // Predicated region
    $region26: #{lora_ip_attn_forward.7} parent=1 // pred_check
      _
    $region27: #{lora_ip_attn_forward.7} parent=1 // pred_check_branch
      %140 = sbr.rel (0) target = $region29
    $region28: #{lora_ip_attn_forward.7} parent=1 // pred_region
      %141 = dma.done [#allocation4], 512
    $region29: #{lora_ip_attn_forward.7} parent=1 // pred_fallthru
      _
    %142 = vsyncpa [#allocation4], 1

// kernel: lora_ip_attn_forward.6
$region0: #{lora_ip_attn_forward.6}
  #allocation0 [shape = 'u32[]', space=smem, size = 0x4, offset = 0x4, fixed_abs, tag = 'smem constant byte address 0x4 - core index']
  #allocation1 [shape = 'u32[144,128]{1,0:T(1,128)}', space=vmem, size = 0x12000, scoped, tag = 'internal scratch']
  %s0 = inlined_call_operand.vmem [shape: f32[2,16,32], index: 0, kind: input, shape index: {}]
  %s1 = inlined_call_operand.vmem [shape: f32[2,8,32], index: 1, kind: input, shape index: {}]
  %s2 = inlined_call_operand.vmem [shape: f32[2,8,32], index: 2, kind: input, shape index: {}]
  %s3 = inlined_call_operand.vmem [shape: f32[2,16,32], index: 3, kind: output, shape index: {}]
  %s4 = sld [smem:[#allocation0]]
  $region45: #{lora_ip_attn_forward.6} parent=0
    _
  %s6 = ssub.s32 1, %s4
  %s7 = scalar_select 0, %s6, %s4
  loop: start=0, step=1, limit=4
  $region2: #{lora_ip_attn_forward.6} parent=0 // loop_pre_header
    _
  $region3: #{lora_ip_attn_forward.6} parent=0 // loop_header
    %s9 = sphi 0, %s13
    %p10 = scmp.ge.s32.totalorder %s9, 4
    %s16 = sphi 0, %s28
    %s17 = sphi 0, %s24
    %s18 = sphi 0, %s16
    %s19 = sphi 0, %s17
    %s20 = sphi 0, %s18
    %s21 = sphi 0, %s19
    %s33 = sphi 0, %s35
    %s36 = sphi 0, %s33
    %s37 = sphi 0, %s36
    %s53 = sphi 0, %s37
    %s59 = sphi 0, %s61
    %s62 = sphi 0, %s59
    %s63 = sphi 0, %s62
    %s79 = sphi 0, %s63
    %s85 = sphi 0, %s87
    %s88 = sphi 0, %s85
    %s89 = sphi 0, %s88
    %s105 = sphi 0, %s89
    %s113 = sphi 0, %s115
    %s116 = sphi 0, %s113
    %s117 = sphi 0, %s116
    %s133 = sphi 0, %s117
  $region4: #{lora_ip_attn_forward.6} parent=0 // loop_header_branch
    %12 = sbr.rel (%p10) target = $region8
  $region5: #{lora_ip_attn_forward.6} parent=0 // loop_body
    %s14 = ssub.s32 %s9, 1
    %s15 = ssub.s32 %s9, 2
    %s22 = sadd.s32 1, %s17
    %p23 = scmp.ge.s32.totalorder %s22, 1
    %s24 = scalar_select %p23, 0, %s22
    %s25 = sadd.s32 1, %s16
    %s26 = scalar_select %p23, %s25, %s16
    %p27 = scmp.ge.s32.totalorder %s26, 2
    %s28 = scalar_select %p27, 0, %s26
    %s29 = ssub.s32 %s16, %s28
    %s30 = ssub.s32 %s17, %s24
    %s31 = sor.u32 %s29, %s30
    %p32 = scmp.eq.s32.totalorder %s31, 0
    %s34 = sadd.s32 %s33, 1
    %s35 = scalar_select %p32, %s33, %s34
    %p38 = pneg %p32
    %p39 = scmp.eq.s32.totalorder %s9, 1
    %p40 = por %p38, %p39
    %p41 = scmp.ne.s32.totalorder %s33, %s36
    %p42 = scmp.eq.s32.totalorder %s9, 0
    %p43 = por %p41, %p42
    %p44 = scmp.ne.s32.totalorder %s33, %s36
    %p45 = scmp.eq.s32.totalorder %s14, 1
    %p46 = por %p44, %p45
    %p47 = scmp.ne.s32.totalorder %s36, %s37
    %p48 = scmp.eq.s32.totalorder %s14, 0
    %p49 = por %p47, %p48
    %p50 = scmp.ne.s32.totalorder %s36, %s37
    %p51 = scmp.eq.s32.totalorder %s15, 1
    %p52 = por %p50, %p51
    %p54 = scmp.ne.s32.totalorder %s37, %s53
    %p55 = scmp.eq.s32.totalorder %s15, 0
    %p56 = por %p54, %p55
    %s57 = ssub.s32 %s16, %s28
    %p58 = scmp.eq.s32.totalorder %s57, 0
    %s60 = sadd.s32 %s59, 1
    %s61 = scalar_select %p58, %s59, %s60
    %p64 = pneg %p58
    %p65 = scmp.eq.s32.totalorder %s9, 1
    %p66 = por %p64, %p65
    %p67 = scmp.ne.s32.totalorder %s59, %s62
    %p68 = scmp.eq.s32.totalorder %s9, 0
    %p69 = por %p67, %p68
    %p70 = scmp.ne.s32.totalorder %s59, %s62
    %p71 = scmp.eq.s32.totalorder %s14, 1
    %p72 = por %p70, %p71
    %p73 = scmp.ne.s32.totalorder %s62, %s63
    %p74 = scmp.eq.s32.totalorder %s14, 0
    %p75 = por %p73, %p74
    %p76 = scmp.ne.s32.totalorder %s62, %s63
    %p77 = scmp.eq.s32.totalorder %s15, 1
    %p78 = por %p76, %p77
    %p80 = scmp.ne.s32.totalorder %s63, %s79
    %p81 = scmp.eq.s32.totalorder %s15, 0
    %p82 = por %p80, %p81
    %s83 = ssub.s32 %s16, %s28
    %p84 = scmp.eq.s32.totalorder %s83, 0
    %s86 = sadd.s32 %s85, 1
    %s87 = scalar_select %p84, %s85, %s86
    %p90 = pneg %p84
    %p91 = scmp.eq.s32.totalorder %s9, 1
    %p92 = por %p90, %p91
    %p93 = scmp.ne.s32.totalorder %s85, %s88
    %p94 = scmp.eq.s32.totalorder %s9, 0
    %p95 = por %p93, %p94
    %p96 = scmp.ne.s32.totalorder %s85, %s88
    %p97 = scmp.eq.s32.totalorder %s14, 1
    %p98 = por %p96, %p97
    %p99 = scmp.ne.s32.totalorder %s88, %s89
    %p100 = scmp.eq.s32.totalorder %s14, 0
    %p101 = por %p99, %p100
    %p102 = scmp.ne.s32.totalorder %s88, %s89
    %p103 = scmp.eq.s32.totalorder %s15, 1
    %p104 = por %p102, %p103
    %p106 = scmp.ne.s32.totalorder %s89, %s105
    %p107 = scmp.eq.s32.totalorder %s15, 0
    %p108 = por %p106, %p107
    %s109 = ssub.s32 %s16, %s28
    %s110 = ssub.s32 %s17, %s24
    %s111 = sor.u32 %s109, %s110
    %p112 = scmp.eq.s32.totalorder %s111, 0
    %s114 = sadd.s32 %s113, 1
    %s115 = scalar_select %p112, %s113, %s114
    %p118 = pneg %p112
    %p119 = scmp.eq.s32.totalorder %s9, 1
    %p120 = por %p118, %p119
    %p121 = scmp.ne.s32.totalorder %s113, %s116
    %p122 = scmp.eq.s32.totalorder %s9, 0
    %p123 = por %p121, %p122
    %p124 = scmp.ne.s32.totalorder %s113, %s116
    %p125 = scmp.eq.s32.totalorder %s14, 1
    %p126 = por %p124, %p125
    %p127 = scmp.ne.s32.totalorder %s116, %s117
    %p128 = scmp.eq.s32.totalorder %s14, 0
    %p129 = por %p127, %p128
    %p130 = scmp.ne.s32.totalorder %s116, %s117
    %p131 = scmp.eq.s32.totalorder %s15, 1
    %p132 = por %p130, %p131
    %p134 = scmp.ne.s32.totalorder %s117, %s133
    %p135 = scmp.eq.s32.totalorder %s15, 0
    %p136 = por %p134, %p135
    %p137 = scmp.le.s32.totalorder 1, %s9
    %p138 = scmp.lt.s32.totalorder %s9, 3
    %p139 = pnand %p137, %p138
    %p140 = pneg %p139
    // Predicated region
    $region9: #{lora_ip_attn_forward.6} parent=5 // pred_check
      _
    $region10: #{lora_ip_attn_forward.6} parent=5 // pred_check_branch
      %142 = sbr.rel (%p139) target = $region12
    $region11: #{lora_ip_attn_forward.6} parent=5 // pred_region
      %s143 = ssub.s32 %s9, 1
    $region12: #{lora_ip_attn_forward.6} parent=5 // pred_fallthru
      _
    %p144 = scmp.lt.s32.totalorder %s9, 2
    // Predicated region
    $region13: #{lora_ip_attn_forward.6} parent=5 // pred_check
      %p145 = pneg %p144
    $region14: #{lora_ip_attn_forward.6} parent=5 // pred_check_branch
      %147 = sbr.rel (%p145) target = $region16
    $region15: #{lora_ip_attn_forward.6} parent=5 // pred_region
      // Predicated region
      $region17: #{lora_ip_attn_forward.6} parent=15 // pred_check
        %p148 = pneg %p43
      $region18: #{lora_ip_attn_forward.6} parent=15 // pred_check_branch
        %150 = sbr.rel (%p148) target = $region20
      $region19: #{lora_ip_attn_forward.6} parent=15 // pred_region
        %s151 = smul.u32 2, %s17
        %p152 = scmp.lt.s32.totalorder %s16, 1
        %s153 = scalar_select %p152, %s16, 1
        %p154 = scmp.lt.s32.totalorder %s151, 1
        %s155 = scalar_select %p154, %s151, 1
        %s156 = smul.addr %s153, 2
        %s157 = sadd.s32 %s155, %s156
        %s158 = smul.addr %s157, 8
        %s159 = scalar_lea.vmem %s0, %s158
        %s160 = smul.u32 2, %s17
      $region20: #{lora_ip_attn_forward.6} parent=15 // pred_fallthru
        _
      // Predicated region
      $region21: #{lora_ip_attn_forward.6} parent=15 // pred_check
        %p161 = pneg %p69
      $region22: #{lora_ip_attn_forward.6} parent=15 // pred_check_branch
        %163 = sbr.rel (%p161) target = $region24
      $region23: #{lora_ip_attn_forward.6} parent=15 // pred_region
        %p164 = scmp.lt.s32.totalorder %s16, 1
        %s165 = scalar_select %p164, %s16, 1
        %s166 = smul.addr %s165, 8
        %s167 = scalar_lea.vmem %s1, %s166
      $region24: #{lora_ip_attn_forward.6} parent=15 // pred_fallthru
        _
      // Predicated region
      $region25: #{lora_ip_attn_forward.6} parent=15 // pred_check
        %p168 = pneg %p95
      $region26: #{lora_ip_attn_forward.6} parent=15 // pred_check_branch
        %170 = sbr.rel (%p168) target = $region28
      $region27: #{lora_ip_attn_forward.6} parent=15 // pred_region
        %p171 = scmp.lt.s32.totalorder %s16, 1
        %s172 = scalar_select %p171, %s16, 1
        %s173 = smul.addr %s172, 8
        %s174 = scalar_lea.vmem %s2, %s173
      $region28: #{lora_ip_attn_forward.6} parent=15 // pred_fallthru
        _
    $region16: #{lora_ip_attn_forward.6} parent=5 // pred_fallthru
      _
    %p175 = scmp.le.s32.totalorder 1, %s9
    %p176 = scmp.lt.s32.totalorder %s9, 3
    %p177 = pnand %p175, %p176
    %p178 = pneg %p177
    // Predicated region
    $region29: #{lora_ip_attn_forward.6} parent=5 // pred_check
      _
    $region30: #{lora_ip_attn_forward.6} parent=5 // pred_check_branch
      %180 = sbr.rel (%p177) target = $region32
    $region31: #{lora_ip_attn_forward.6} parent=5 // pred_region
      %s181 = ssub.s32 %s9, 1
      %s182 = smul.u32 2, %s19
      %p183 = scmp.lt.s32.totalorder %s18, 1
      %s184 = scalar_select %p183, %s18, 1
      %p185 = scmp.lt.s32.totalorder %s182, 1
      %s186 = scalar_select %p185, %s182, 1
      %s187 = smul.addr %s184, 2
      %s188 = sadd.s32 %s186, %s187
      %s189 = smul.addr %s188, 8
      %s190 = scalar_lea.vmem %s0, %s189
      %p191 = pneg %p49
      %p192 = pneg %p46
      %p193 = scmp.lt.s32.totalorder %s18, 1
      %s194 = scalar_select %p193, %s18, 1
      %s195 = smul.addr %s194, 8
      %s196 = scalar_lea.vmem %s1, %s195
      %p197 = pneg %p75
      %p198 = pneg %p72
      %p199 = scmp.lt.s32.totalorder %s18, 1
      %s200 = scalar_select %p199, %s18, 1
      %s201 = smul.addr %s200, 8
      %s202 = scalar_lea.vmem %s2, %s201
      %p203 = pneg %p101
      %p204 = pneg %p98
      %p205 = pneg %p129
      %p206 = pneg %p126
      %s207 = smul.u32 2, %s19
      %p208 = scmp.lt.s32.totalorder %s18, 1
      %s209 = scalar_select %p208, %s18, 1
      %p210 = scmp.lt.s32.totalorder %s207, 1
      %s211 = scalar_select %p210, %s207, 1
      %s212 = smul.addr %s209, 2
      %s213 = sadd.s32 %s211, %s212
      %s214 = smul.addr %s213, 8
      %s215 = scalar_lea.vmem %s3, %s214
      %s216 = smul.u32 2, %s19
      %p217 = scmp.lt.s32.totalorder %s18, 1
      %s218 = scalar_select %p217, %s18, 1
      %p219 = scmp.lt.s32.totalorder %s216, 1
      %s220 = scalar_select %p219, %s216, 1
      %s221 = smul.addr %s218, 2
      %s222 = sadd.s32 %s220, %s221
      %s223 = smul.addr %s222, 8
      %s224 = scalar_lea.vmem %s0, %s223
      %s225 = smul.u32 2, %s19
      %p226 = scmp.lt.s32.totalorder %s18, 1
      %s227 = scalar_select %p226, %s18, 1
      %s228 = smul.addr %s227, 8
      %s229 = scalar_lea.vmem %s1, %s228
      %p230 = scmp.lt.s32.totalorder %s18, 1
      %s231 = scalar_select %p230, %s18, 1
      %s232 = smul.addr %s231, 8
      %s233 = scalar_lea.vmem %s2, %s232
      %s234 = smul.u32 2, %s19
      %p235 = scmp.lt.s32.totalorder %s18, 1
      %s236 = scalar_select %p235, %s18, 1
      %p237 = scmp.lt.s32.totalorder %s234, 1
      %s238 = scalar_select %p237, %s234, 1
      %s239 = smul.addr %s236, 2
      %s240 = sadd.s32 %s238, %s239
      %s241 = smul.addr %s240, 8
      %s242 = scalar_lea.vmem %s3, %s241
      %s243 = smul.u32 2, %s19
      %v245 = vld [vmem:[%s224] sm:$0xff]
      %v246 = vld [vmem:[%s224 + $0x8] sm:$0xff]
      %v247 = vmul.f32 %v245, 0.35355338
      %v248 = vmul.f32 %v246, 0.35355338
      %v249 = vld [vmem:[%s229] sm:$0xff]
      %v250 = vld [vmem:[%s233] sm:$0xff]
      %v251 = vpack.c.bf16 %v248, %v247
      %v252 = vpack.c.bf16 %v249, %v249
      %v253 = vpack.c.bf16 %v250, %v250
      %vm254 = vcmask 64512
      %v256 = vsel %vm254, %v251, 0
      %v259 = vsel %vm254, %v252, 0
      %261 = vmatprep.subr.bf16.mxu0 0
      %262 = vmatpush1.bf16.xpose.msra.mxu0 0
      %263 = vmatprep.subr.bf16.mxu0 0
      %264 = vmatpush1.bf16.xpose.msra.mxu0 0
      %265 = vmatprep.subr.bf16.mxu0 0
      %266 = vmatpush1.bf16.xpose.msra.mxu0 0
      %267 = vmatprep.subr.bf16.mxu0 0
      %268 = vmatpush1.bf16.xpose.msra.mxu0 0
      %269 = vmatprep.subr.bf16.mxu0 0
      %270 = vmatpush1.bf16.xpose.msra.mxu0 0
      %271 = vmatprep.subr.bf16.mxu0 0
      %272 = vmatpush1.bf16.xpose.msra.mxu0 0
      %273 = vmatprep.subr.bf16.mxu0 0
      %274 = vmatpush1.bf16.xpose.msra.mxu0 0
      %275 = vmatprep.subr.bf16.mxu0 0
      %276 = vmatpush1.bf16.xpose.msra.mxu0 %v259
      %277 = vmatprep.subr.bf16.mxu0 0
      %278 = vmatpush2.bf16.xpose.msra.mxu0 0
      %279 = vmatprep.subr.bf16.mxu0 0
      %280 = vmatpush2.bf16.xpose.msra.mxu0 0
      %281 = vmatprep.subr.bf16.mxu0 0
      %282 = vmatpush2.bf16.xpose.msra.mxu0 0
      %283 = vmatprep.subr.bf16.mxu0 0
      %284 = vmatpush2.bf16.xpose.msra.mxu0 0
      %285 = vmatprep.subr.bf16.mxu0 0
      %286 = vmatpush2.bf16.xpose.msra.mxu0 0
      %287 = vmatprep.subr.bf16.mxu0 0
      %288 = vmatpush2.bf16.xpose.msra.mxu0 0
      %289 = vmatprep.subr.bf16.mxu0 0
      %290 = vmatpush2.bf16.xpose.msra.mxu0 0
      %291 = vmatprep.subr.bf16.mxu0 0
      %292 = vmatpush2.bf16.xpose.msra.mxu0 0
      %293 = vmatprep.mubr.bf16.mxu0 0
      %294 = vmatmul.mubr.bf16.gmra.mxu0 %v256
      %v295 = vpop.f32.mrf.mxu0
      %v296 = vadd.f32 0.0, %v295
      %v297 = vpop.f32.mrf.mxu0
      %v298 = vpop.f32.mrf.mxu0
      %v299 = vadd.f32 0.0, %v298
      %v300 = vpop.f32.mrf.mxu0
      %301 = vdwg.mxu0
      %v302 = vsel %vm254, %v296, -inf
      %303 = vmax.xlane.f32.xlu0 %v302
      %v304 = vpop.xlane.xlu0 %303
      %v305 = vsel %vm254, %v299, -inf
      %306 = vmax.xlane.f32.xlu0 %v305
      %v307 = vpop.xlane.xlu0 %306
      %v308 = vsub.f32 %v296, %v304
      %v309 = vsub.f32 %v299, %v307
      %v310 = vmul.f32 %v308, 1.442695
      %v311 = vpow.pop %v310
      %v312 = vmul.f32 %v309, 1.442695
      %v313 = vpow.pop %v312
      %v314 = vsel %vm254, %v311, 0.0
      %315 = vadd.xlane.f32.xlu0 %v314
      %v316 = vpop.xlane.xlu0 %315
      %v317 = vsel %vm254, %v313, 0.0
      %318 = vadd.xlane.f32.xlu0 %v317
      %v319 = vpop.xlane.xlu0 %318
      %v320 = vrcp.pop %v316
      %v321 = vrcp.pop %v319
      %v322 = vmul.f32 %v311, %v320
      %v323 = vmul.f32 %v313, %v321
      %v324 = vpack.c.bf16 %v323, %v322
      %v326 = vsel %vm254, %v324, 0
      %vm328 = vcmask 1043456
      %v330 = vsel %vm328, %v253, 0
      %332 = vmatprep.subr.bf16.mxu0 0
      %333 = vmatpush1.bf16.msra.mxu0 0
      %334 = vmatprep.subr.bf16.mxu0 0
      %335 = vmatpush1.bf16.msra.mxu0 0
      %336 = vmatprep.subr.bf16.mxu0 0
      %337 = vmatpush1.bf16.msra.mxu0 0
      %338 = vmatprep.subr.bf16.mxu0 0
      %339 = vmatpush1.bf16.msra.mxu0 0
      %340 = vmatprep.subr.bf16.mxu0 0
      %341 = vmatpush1.bf16.msra.mxu0 0
      %342 = vmatprep.subr.bf16.mxu0 0
      %343 = vmatpush1.bf16.msra.mxu0 0
      %344 = vmatprep.subr.bf16.mxu0 0
      %345 = vmatpush1.bf16.msra.mxu0 0
      %346 = vmatprep.subr.bf16.mxu0 0
      %347 = vmatpush1.bf16.msra.mxu0 %v330
      %348 = vmatprep.subr.bf16.mxu0 0
      %349 = vmatpush2.bf16.msra.mxu0 0
      %350 = vmatprep.subr.bf16.mxu0 0
      %351 = vmatpush2.bf16.msra.mxu0 0
      %352 = vmatprep.subr.bf16.mxu0 0
      %353 = vmatpush2.bf16.msra.mxu0 0
      %354 = vmatprep.subr.bf16.mxu0 0
      %355 = vmatpush2.bf16.msra.mxu0 0
      %356 = vmatprep.subr.bf16.mxu0 0
      %357 = vmatpush2.bf16.msra.mxu0 0
      %358 = vmatprep.subr.bf16.mxu0 0
      %359 = vmatpush2.bf16.msra.mxu0 0
      %360 = vmatprep.subr.bf16.mxu0 0
      %361 = vmatpush2.bf16.msra.mxu0 0
      %362 = vmatprep.subr.bf16.mxu0 0
      %363 = vmatpush2.bf16.msra.mxu0 0
      %364 = vmatprep.mubr.bf16.mxu0 0
      %365 = vmatmul.mubr.bf16.gmra.mxu0 %v326
      %v366 = vpop.f32.mrf.mxu0
      %v367 = vadd.f32 0.0, %v366
      %v368 = vpop.f32.mrf.mxu0
      %v369 = vpop.f32.mrf.mxu0
      %v370 = vadd.f32 0.0, %v369
      %v371 = vpop.f32.mrf.mxu0
      %372 = vdwg.mxu0
      %373 = vst.msk [vmem:[%s242] sm:$0xff] %vm254, %v367
      %374 = vst.msk [vmem:[%s242 + $0x8] sm:$0xff] %vm254, %v370
      %376 = vrot.lane.b32.xlu0 %v251, 120
      %v377 = vpop.permute.xlu0 %376
      %379 = vrot.lane.b32.xlu0 %v252, 120
      %v380 = vpop.permute.xlu0 %379
      %v382 = vsel %vm254, %v377, 0
      %v385 = vsel %vm254, %v380, 0
      %387 = vmatprep.subr.bf16.mxu0 0
      %388 = vmatpush1.bf16.xpose.msra.mxu0 0
      %389 = vmatprep.subr.bf16.mxu0 0
      %390 = vmatpush1.bf16.xpose.msra.mxu0 0
      %391 = vmatprep.subr.bf16.mxu0 0
      %392 = vmatpush1.bf16.xpose.msra.mxu0 0
      %393 = vmatprep.subr.bf16.mxu0 0
      %394 = vmatpush1.bf16.xpose.msra.mxu0 0
      %395 = vmatprep.subr.bf16.mxu0 0
      %396 = vmatpush1.bf16.xpose.msra.mxu0 0
      %397 = vmatprep.subr.bf16.mxu0 0
      %398 = vmatpush1.bf16.xpose.msra.mxu0 0
      %399 = vmatprep.subr.bf16.mxu0 0
      %400 = vmatpush1.bf16.xpose.msra.mxu0 0
      %401 = vmatprep.subr.bf16.mxu0 0
      %402 = vmatpush1.bf16.xpose.msra.mxu0 %v385
      %403 = vmatprep.subr.bf16.mxu0 0
      %404 = vmatpush2.bf16.xpose.msra.mxu0 0
      %405 = vmatprep.subr.bf16.mxu0 0
      %406 = vmatpush2.bf16.xpose.msra.mxu0 0
      %407 = vmatprep.subr.bf16.mxu0 0
      %408 = vmatpush2.bf16.xpose.msra.mxu0 0
      %409 = vmatprep.subr.bf16.mxu0 0
      %410 = vmatpush2.bf16.xpose.msra.mxu0 0
      %411 = vmatprep.subr.bf16.mxu0 0
      %412 = vmatpush2.bf16.xpose.msra.mxu0 0
      %413 = vmatprep.subr.bf16.mxu0 0
      %414 = vmatpush2.bf16.xpose.msra.mxu0 0
      %415 = vmatprep.subr.bf16.mxu0 0
      %416 = vmatpush2.bf16.xpose.msra.mxu0 0
      %417 = vmatprep.subr.bf16.mxu0 0
      %418 = vmatpush2.bf16.xpose.msra.mxu0 0
      %419 = vmatprep.mubr.bf16.mxu0 0
      %420 = vmatmul.mubr.bf16.gmra.mxu0 %v382
      %v421 = vpop.f32.mrf.mxu0
      %v422 = vadd.f32 0.0, %v421
      %v423 = vpop.f32.mrf.mxu0
      %v424 = vpop.f32.mrf.mxu0
      %v425 = vadd.f32 0.0, %v424
      %v426 = vpop.f32.mrf.mxu0
      %427 = vdwg.mxu0
      %v428 = vsel %vm254, %v422, -inf
      %429 = vmax.xlane.f32.xlu0 %v428
      %v430 = vpop.xlane.xlu0 %429
      %v431 = vsel %vm254, %v425, -inf
      %432 = vmax.xlane.f32.xlu0 %v431
      %v433 = vpop.xlane.xlu0 %432
      %v434 = vsub.f32 %v422, %v430
      %v435 = vsub.f32 %v425, %v433
      %v436 = vmul.f32 %v434, 1.442695
      %v437 = vpow.pop %v436
      %v438 = vmul.f32 %v435, 1.442695
      %v439 = vpow.pop %v438
      %v440 = vsel %vm254, %v437, 0.0
      %441 = vadd.xlane.f32.xlu0 %v440
      %v442 = vpop.xlane.xlu0 %441
      %v443 = vsel %vm254, %v439, 0.0
      %444 = vadd.xlane.f32.xlu0 %v443
      %v445 = vpop.xlane.xlu0 %444
      %v446 = vrcp.pop %v442
      %v447 = vrcp.pop %v445
      %v448 = vmul.f32 %v437, %v446
      %v449 = vmul.f32 %v439, %v447
      %v450 = vpack.c.bf16 %v449, %v448
      %452 = vrot.lane.b32.xlu0 %v253, 120
      %v453 = vpop.permute.xlu0 %452
      %v455 = vsel %vm254, %v450, 0
      %v458 = vsel %vm328, %v453, 0
      %460 = vmatprep.subr.bf16.mxu0 0
      %461 = vmatpush1.bf16.msra.mxu0 0
      %462 = vmatprep.subr.bf16.mxu0 0
      %463 = vmatpush1.bf16.msra.mxu0 0
      %464 = vmatprep.subr.bf16.mxu0 0
      %465 = vmatpush1.bf16.msra.mxu0 0
      %466 = vmatprep.subr.bf16.mxu0 0
      %467 = vmatpush1.bf16.msra.mxu0 0
      %468 = vmatprep.subr.bf16.mxu0 0
      %469 = vmatpush1.bf16.msra.mxu0 0
      %470 = vmatprep.subr.bf16.mxu0 0
      %471 = vmatpush1.bf16.msra.mxu0 0
      %472 = vmatprep.subr.bf16.mxu0 0
      %473 = vmatpush1.bf16.msra.mxu0 0
      %474 = vmatprep.subr.bf16.mxu0 0
      %475 = vmatpush1.bf16.msra.mxu0 %v458
      %476 = vmatprep.subr.bf16.mxu0 0
      %477 = vmatpush2.bf16.msra.mxu0 0
      %478 = vmatprep.subr.bf16.mxu0 0
      %479 = vmatpush2.bf16.msra.mxu0 0
      %480 = vmatprep.subr.bf16.mxu0 0
      %481 = vmatpush2.bf16.msra.mxu0 0
      %482 = vmatprep.subr.bf16.mxu0 0
      %483 = vmatpush2.bf16.msra.mxu0 0
      %484 = vmatprep.subr.bf16.mxu0 0
      %485 = vmatpush2.bf16.msra.mxu0 0
      %486 = vmatprep.subr.bf16.mxu0 0
      %487 = vmatpush2.bf16.msra.mxu0 0
      %488 = vmatprep.subr.bf16.mxu0 0
      %489 = vmatpush2.bf16.msra.mxu0 0
      %490 = vmatprep.subr.bf16.mxu0 0
      %491 = vmatpush2.bf16.msra.mxu0 0
      %492 = vmatprep.mubr.bf16.mxu0 0
      %493 = vmatmul.mubr.bf16.gmra.mxu0 %v455
      %v494 = vpop.f32.mrf.mxu0
      %v495 = vadd.f32 0.0, %v494
      %v496 = vpop.f32.mrf.mxu0
      %v497 = vpop.f32.mrf.mxu0
      %v498 = vadd.f32 0.0, %v497
      %v499 = vpop.f32.mrf.mxu0
      %500 = vdwg.mxu0
      %503 = vrot.lane.b32.xlu0 %v495, 8
      %v504 = vpop.permute.xlu0 %503
      %505 = vrot.lane.b32.xlu0 %v498, 8
      %v506 = vpop.permute.xlu0 %505
      %vm509 = vcmask 130112
      %510 = vst.msk [vmem:[%s242] sm:$0xff] %vm509, %v504
      %511 = vst.msk [vmem:[%s242 + $0x8] sm:$0xff] %vm509, %v506
      %512 = vrot.lane.b32.xlu0 %v251, 112
      %v513 = vpop.permute.xlu0 %512
      %514 = vrot.lane.b32.xlu0 %v252, 112
      %v515 = vpop.permute.xlu0 %514
      %v517 = vsel %vm254, %v513, 0
      %v520 = vsel %vm254, %v515, 0
      %522 = vmatprep.subr.bf16.mxu0 0
      %523 = vmatpush1.bf16.xpose.msra.mxu0 0
      %524 = vmatprep.subr.bf16.mxu0 0
      %525 = vmatpush1.bf16.xpose.msra.mxu0 0
      %526 = vmatprep.subr.bf16.mxu0 0
      %527 = vmatpush1.bf16.xpose.msra.mxu0 0
      %528 = vmatprep.subr.bf16.mxu0 0
      %529 = vmatpush1.bf16.xpose.msra.mxu0 0
      %530 = vmatprep.subr.bf16.mxu0 0
      %531 = vmatpush1.bf16.xpose.msra.mxu0 0
      %532 = vmatprep.subr.bf16.mxu0 0
      %533 = vmatpush1.bf16.xpose.msra.mxu0 0
      %534 = vmatprep.subr.bf16.mxu0 0
      %535 = vmatpush1.bf16.xpose.msra.mxu0 0
      %536 = vmatprep.subr.bf16.mxu0 0
      %537 = vmatpush1.bf16.xpose.msra.mxu0 %v520
      %538 = vmatprep.subr.bf16.mxu0 0
      %539 = vmatpush2.bf16.xpose.msra.mxu0 0
      %540 = vmatprep.subr.bf16.mxu0 0
      %541 = vmatpush2.bf16.xpose.msra.mxu0 0
      %542 = vmatprep.subr.bf16.mxu0 0
      %543 = vmatpush2.bf16.xpose.msra.mxu0 0
      %544 = vmatprep.subr.bf16.mxu0 0
      %545 = vmatpush2.bf16.xpose.msra.mxu0 0
      %546 = vmatprep.subr.bf16.mxu0 0
      %547 = vmatpush2.bf16.xpose.msra.mxu0 0
      %548 = vmatprep.subr.bf16.mxu0 0
      %549 = vmatpush2.bf16.xpose.msra.mxu0 0
      %550 = vmatprep.subr.bf16.mxu0 0
      %551 = vmatpush2.bf16.xpose.msra.mxu0 0
      %552 = vmatprep.subr.bf16.mxu0 0
      %553 = vmatpush2.bf16.xpose.msra.mxu0 0
      %554 = vmatprep.mubr.bf16.mxu0 0
      %555 = vmatmul.mubr.bf16.gmra.mxu0 %v517
      %v556 = vpop.f32.mrf.mxu0
      %v557 = vadd.f32 0.0, %v556
      %v558 = vpop.f32.mrf.mxu0
      %v559 = vpop.f32.mrf.mxu0
      %v560 = vadd.f32 0.0, %v559
      %v561 = vpop.f32.mrf.mxu0
      %562 = vdwg.mxu0
      %v563 = vsel %vm254, %v557, -inf
      %564 = vmax.xlane.f32.xlu0 %v563
      %v565 = vpop.xlane.xlu0 %564
      %v566 = vsel %vm254, %v560, -inf
      %567 = vmax.xlane.f32.xlu0 %v566
      %v568 = vpop.xlane.xlu0 %567
      %v569 = vsub.f32 %v557, %v565
      %v570 = vsub.f32 %v560, %v568
      %v571 = vmul.f32 %v569, 1.442695
      %v572 = vpow.pop %v571
      %v573 = vmul.f32 %v570, 1.442695
      %v574 = vpow.pop %v573
      %v575 = vsel %vm254, %v572, 0.0
      %576 = vadd.xlane.f32.xlu0 %v575
      %v577 = vpop.xlane.xlu0 %576
      %v578 = vsel %vm254, %v574, 0.0
      %579 = vadd.xlane.f32.xlu0 %v578
      %v580 = vpop.xlane.xlu0 %579
      %v581 = vrcp.pop %v577
      %v582 = vrcp.pop %v580
      %v583 = vmul.f32 %v572, %v581
      %v584 = vmul.f32 %v574, %v582
      %v585 = vpack.c.bf16 %v584, %v583
      %586 = vrot.lane.b32.xlu0 %v253, 112
      %v587 = vpop.permute.xlu0 %586
      %v589 = vsel %vm254, %v585, 0
      %v592 = vsel %vm328, %v587, 0
      %594 = vmatprep.subr.bf16.mxu0 0
      %595 = vmatpush1.bf16.msra.mxu0 0
      %596 = vmatprep.subr.bf16.mxu0 0
      %597 = vmatpush1.bf16.msra.mxu0 0
      %598 = vmatprep.subr.bf16.mxu0 0
      %599 = vmatpush1.bf16.msra.mxu0 0
      %600 = vmatprep.subr.bf16.mxu0 0
      %601 = vmatpush1.bf16.msra.mxu0 0
      %602 = vmatprep.subr.bf16.mxu0 0
      %603 = vmatpush1.bf16.msra.mxu0 0
      %604 = vmatprep.subr.bf16.mxu0 0
      %605 = vmatpush1.bf16.msra.mxu0 0
      %606 = vmatprep.subr.bf16.mxu0 0
      %607 = vmatpush1.bf16.msra.mxu0 0
      %608 = vmatprep.subr.bf16.mxu0 0
      %609 = vmatpush1.bf16.msra.mxu0 %v592
      %610 = vmatprep.subr.bf16.mxu0 0
      %611 = vmatpush2.bf16.msra.mxu0 0
      %612 = vmatprep.subr.bf16.mxu0 0
      %613 = vmatpush2.bf16.msra.mxu0 0
      %614 = vmatprep.subr.bf16.mxu0 0
      %615 = vmatpush2.bf16.msra.mxu0 0
      %616 = vmatprep.subr.bf16.mxu0 0
      %617 = vmatpush2.bf16.msra.mxu0 0
      %618 = vmatprep.subr.bf16.mxu0 0
      %619 = vmatpush2.bf16.msra.mxu0 0
      %620 = vmatprep.subr.bf16.mxu0 0
      %621 = vmatpush2.bf16.msra.mxu0 0
      %622 = vmatprep.subr.bf16.mxu0 0
      %623 = vmatpush2.bf16.msra.mxu0 0
      %624 = vmatprep.subr.bf16.mxu0 0
      %625 = vmatpush2.bf16.msra.mxu0 0
      %626 = vmatprep.mubr.bf16.mxu0 0
      %627 = vmatmul.mubr.bf16.gmra.mxu0 %v589
      %v628 = vpop.f32.mrf.mxu0
      %v629 = vadd.f32 0.0, %v628
      %v630 = vpop.f32.mrf.mxu0
      %v631 = vpop.f32.mrf.mxu0
      %v632 = vadd.f32 0.0, %v631
      %v633 = vpop.f32.mrf.mxu0
      %634 = vdwg.mxu0
      %637 = vrot.lane.b32.xlu0 %v629, 16
      %v638 = vpop.permute.xlu0 %637
      %639 = vrot.lane.b32.xlu0 %v632, 16
      %v640 = vpop.permute.xlu0 %639
      %vm643 = vcmask 195712
      %644 = vst.msk [vmem:[%s242] sm:$0xff] %vm643, %v638
      %645 = vst.msk [vmem:[%s242 + $0x8] sm:$0xff] %vm643, %v640
      %646 = vrot.lane.b32.xlu0 %v251, 104
      %v647 = vpop.permute.xlu0 %646
      %648 = vrot.lane.b32.xlu0 %v252, 104
      %v649 = vpop.permute.xlu0 %648
      %v651 = vsel %vm254, %v647, 0
      %v654 = vsel %vm254, %v649, 0
      %656 = vmatprep.subr.bf16.mxu0 0
      %657 = vmatpush1.bf16.xpose.msra.mxu0 0
      %658 = vmatprep.subr.bf16.mxu0 0
      %659 = vmatpush1.bf16.xpose.msra.mxu0 0
      %660 = vmatprep.subr.bf16.mxu0 0
      %661 = vmatpush1.bf16.xpose.msra.mxu0 0
      %662 = vmatprep.subr.bf16.mxu0 0
      %663 = vmatpush1.bf16.xpose.msra.mxu0 0
      %664 = vmatprep.subr.bf16.mxu0 0
      %665 = vmatpush1.bf16.xpose.msra.mxu0 0
      %666 = vmatprep.subr.bf16.mxu0 0
      %667 = vmatpush1.bf16.xpose.msra.mxu0 0
      %668 = vmatprep.subr.bf16.mxu0 0
      %669 = vmatpush1.bf16.xpose.msra.mxu0 0
      %670 = vmatprep.subr.bf16.mxu0 0
      %671 = vmatpush1.bf16.xpose.msra.mxu0 %v654
      %672 = vmatprep.subr.bf16.mxu0 0
      %673 = vmatpush2.bf16.xpose.msra.mxu0 0
      %674 = vmatprep.subr.bf16.mxu0 0
      %675 = vmatpush2.bf16.xpose.msra.mxu0 0
      %676 = vmatprep.subr.bf16.mxu0 0
      %677 = vmatpush2.bf16.xpose.msra.mxu0 0
      %678 = vmatprep.subr.bf16.mxu0 0
      %679 = vmatpush2.bf16.xpose.msra.mxu0 0
      %680 = vmatprep.subr.bf16.mxu0 0
      %681 = vmatpush2.bf16.xpose.msra.mxu0 0
      %682 = vmatprep.subr.bf16.mxu0 0
      %683 = vmatpush2.bf16.xpose.msra.mxu0 0
      %684 = vmatprep.subr.bf16.mxu0 0
      %685 = vmatpush2.bf16.xpose.msra.mxu0 0
      %686 = vmatprep.subr.bf16.mxu0 0
      %687 = vmatpush2.bf16.xpose.msra.mxu0 0
      %688 = vmatprep.mubr.bf16.mxu0 0
      %689 = vmatmul.mubr.bf16.gmra.mxu0 %v651
      %v690 = vpop.f32.mrf.mxu0
      %v691 = vadd.f32 0.0, %v690
      %v692 = vpop.f32.mrf.mxu0
      %v693 = vpop.f32.mrf.mxu0
      %v694 = vadd.f32 0.0, %v693
      %v695 = vpop.f32.mrf.mxu0
      %696 = vdwg.mxu0
      %v697 = vsel %vm254, %v691, -inf
      %698 = vmax.xlane.f32.xlu0 %v697
      %v699 = vpop.xlane.xlu0 %698
      %v700 = vsel %vm254, %v694, -inf
      %701 = vmax.xlane.f32.xlu0 %v700
      %v702 = vpop.xlane.xlu0 %701
      %v703 = vsub.f32 %v691, %v699
      %v704 = vsub.f32 %v694, %v702
      %v705 = vmul.f32 %v703, 1.442695
      %v706 = vpow.pop %v705
      %v707 = vmul.f32 %v704, 1.442695
      %v708 = vpow.pop %v707
      %v709 = vsel %vm254, %v706, 0.0
      %710 = vadd.xlane.f32.xlu0 %v709
      %v711 = vpop.xlane.xlu0 %710
      %v712 = vsel %vm254, %v708, 0.0
      %713 = vadd.xlane.f32.xlu0 %v712
      %v714 = vpop.xlane.xlu0 %713
      %v715 = vrcp.pop %v711
      %v716 = vrcp.pop %v714
      %v717 = vmul.f32 %v706, %v715
      %v718 = vmul.f32 %v708, %v716
      %v719 = vpack.c.bf16 %v718, %v717
      %720 = vrot.lane.b32.xlu0 %v253, 104
      %v721 = vpop.permute.xlu0 %720
      %v723 = vsel %vm254, %v719, 0
      %v726 = vsel %vm328, %v721, 0
      %728 = vmatprep.subr.bf16.mxu0 0
      %729 = vmatpush1.bf16.msra.mxu0 0
      %730 = vmatprep.subr.bf16.mxu0 0
      %731 = vmatpush1.bf16.msra.mxu0 0
      %732 = vmatprep.subr.bf16.mxu0 0
      %733 = vmatpush1.bf16.msra.mxu0 0
      %734 = vmatprep.subr.bf16.mxu0 0
      %735 = vmatpush1.bf16.msra.mxu0 0
      %736 = vmatprep.subr.bf16.mxu0 0
      %737 = vmatpush1.bf16.msra.mxu0 0
      %738 = vmatprep.subr.bf16.mxu0 0
      %739 = vmatpush1.bf16.msra.mxu0 0
      %740 = vmatprep.subr.bf16.mxu0 0
      %741 = vmatpush1.bf16.msra.mxu0 0
      %742 = vmatprep.subr.bf16.mxu0 0
      %743 = vmatpush1.bf16.msra.mxu0 %v726
      %744 = vmatprep.subr.bf16.mxu0 0
      %745 = vmatpush2.bf16.msra.mxu0 0
      %746 = vmatprep.subr.bf16.mxu0 0
      %747 = vmatpush2.bf16.msra.mxu0 0
      %748 = vmatprep.subr.bf16.mxu0 0
      %749 = vmatpush2.bf16.msra.mxu0 0
      %750 = vmatprep.subr.bf16.mxu0 0
      %751 = vmatpush2.bf16.msra.mxu0 0
      %752 = vmatprep.subr.bf16.mxu0 0
      %753 = vmatpush2.bf16.msra.mxu0 0
      %754 = vmatprep.subr.bf16.mxu0 0
      %755 = vmatpush2.bf16.msra.mxu0 0
      %756 = vmatprep.subr.bf16.mxu0 0
      %757 = vmatpush2.bf16.msra.mxu0 0
      %758 = vmatprep.subr.bf16.mxu0 0
      %759 = vmatpush2.bf16.msra.mxu0 0
      %760 = vmatprep.mubr.bf16.mxu0 0
      %761 = vmatmul.mubr.bf16.gmra.mxu0 %v723
      %v762 = vpop.f32.mrf.mxu0
      %v763 = vadd.f32 0.0, %v762
      %v764 = vpop.f32.mrf.mxu0
      %v765 = vpop.f32.mrf.mxu0
      %v766 = vadd.f32 0.0, %v765
      %v767 = vpop.f32.mrf.mxu0
      %768 = vdwg.mxu0
      %771 = vrot.lane.b32.xlu0 %v763, 24
      %v772 = vpop.permute.xlu0 %771
      %773 = vrot.lane.b32.xlu0 %v766, 24
      %v774 = vpop.permute.xlu0 %773
      %vm777 = vcmask 261312
      %778 = vst.msk [vmem:[%s242] sm:$0xff] %vm777, %v772
      %779 = vst.msk [vmem:[%s242 + $0x8] sm:$0xff] %vm777, %v774
      %s780 = smul.u32 2, %s19
      %p781 = scmp.lt.s32.totalorder %s18, 1
      %s782 = scalar_select %p781, %s18, 1
      %p783 = scmp.lt.s32.totalorder %s780, 1
      %s784 = scalar_select %p783, %s780, 1
      %s785 = smul.addr %s782, 2
      %s786 = sadd.s32 %s784, %s785
      %s787 = smul.addr %s786, 8
      %s788 = scalar_lea.vmem %s3, %s787
      // Predicated region
      $region33: #{lora_ip_attn_forward.6} parent=31 // pred_check
        %p789 = pneg %p126
      $region34: #{lora_ip_attn_forward.6} parent=31 // pred_check_branch
        %791 = sbr.rel (%p789) target = $region36
      $region35: #{lora_ip_attn_forward.6} parent=31 // pred_region
        %s792 = smul.u32 2, %s19
      $region36: #{lora_ip_attn_forward.6} parent=31 // pred_fallthru
        _
    $region32: #{lora_ip_attn_forward.6} parent=5 // pred_fallthru
      _
    %p793 = scmp.le.s32.totalorder 2, %s9
    // Predicated region
    $region37: #{lora_ip_attn_forward.6} parent=5 // pred_check
      %p794 = pneg %p793
    $region38: #{lora_ip_attn_forward.6} parent=5 // pred_check_branch
      %796 = sbr.rel (%p794) target = $region40
    $region39: #{lora_ip_attn_forward.6} parent=5 // pred_region
      %s797 = ssub.s32 %s9, 2
      // Predicated region
      $region41: #{lora_ip_attn_forward.6} parent=39 // pred_check
        %p798 = pneg %p132
      $region42: #{lora_ip_attn_forward.6} parent=39 // pred_check_branch
        %800 = sbr.rel (%p798) target = $region44
      $region43: #{lora_ip_attn_forward.6} parent=39 // pred_region
        %s801 = smul.u32 2, %s21
        %p802 = scmp.lt.s32.totalorder %s20, 1
        %s803 = scalar_select %p802, %s20, 1
        %p804 = scmp.lt.s32.totalorder %s801, 1
        %s805 = scalar_select %p804, %s801, 1
        %s806 = smul.addr %s803, 2
        %s807 = sadd.s32 %s805, %s806
        %s808 = smul.addr %s807, 8
        %s809 = scalar_lea.vmem %s3, %s808
      $region44: #{lora_ip_attn_forward.6} parent=39 // pred_fallthru
        _
    $region40: #{lora_ip_attn_forward.6} parent=5 // pred_fallthru
      _
  $region6: #{lora_ip_attn_forward.6} parent=0 // loop_footer
    %s13 = sadd.s32 1, %s9
  $region7: #{lora_ip_attn_forward.6} parent=0 // loop_footer_branch
    %8 = sbr.rel target = $region3
  $region8: #{lora_ip_attn_forward.6} parent=0 // loop_exit
    _

</llo_original>
